<compile_context>
chip_gen: v5e
topology: v5e:2x2
jax: 0.10.0
libtpu: 0.0.40
codegen_flags: <defaults>
</compile_context>

<pallas_src>
import functools
from typing import NamedTuple

import jax
import jax.numpy as jnp
from jax.experimental import pallas as pl
from jax.experimental.pallas import tpu as pltpu


_SQRT_HALF = 0.7071067811865476
_LN_EPS = 1e-5


# --------------------------------------------------------------------------- #
# Kernel
# --------------------------------------------------------------------------- #
def multitask_adapter_kernel(x_ref, wb_ref, bb_ref, wd_ref, bd_ref, wu_ref,
                             bu_ref, gamma_ref, beta_ref, wh_ref, bh_ref,
                             o_ref):
    """One row-tile: backbone linear -> adapter (GELU bottleneck + LN) -> task head."""
    # x arrives f32 from HBM; cast to bf16 in-kernel for the MXU (cheap VPU pack).
    x = x_ref[...].astype(jnp.bfloat16)                                # (tile_m, D)

    # synthetic backbone: Linear(D, D); bf16 MXU operands, f32 accumulate/epilogue
    h = jnp.dot(x, wb_ref[...], preferred_element_type=jnp.float32) + bb_ref[...]
    residual = h

    # down_proj: Linear(D, BNp)   (bottleneck zero-padded to BNp lanes)
    d = jnp.dot(h.astype(jnp.bfloat16), wd_ref[...],
                preferred_element_type=jnp.float32) + bd_ref[...]
    # exact GELU (erf), matches torch.nn.GELU() default
    d = 0.5 * d * (1.0 + jax.lax.erf(d * jnp.float32(_SQRT_HALF)))

    # up_proj: Linear(BNp, D); dropout is identity in eval mode
    u = jnp.dot(d.astype(jnp.bfloat16), wu_ref[...],
                preferred_element_type=jnp.float32) + bu_ref[...]
    y = u + residual

    # LayerNorm over last dim; two-pass (centered) variance avoids cancellation.
    mean = jnp.mean(y, axis=-1, keepdims=True)
    yc = y - mean
    var = jnp.mean(yc * yc, axis=-1, keepdims=True)
    feats = yc * jax.lax.rsqrt(var + jnp.float32(_LN_EPS))
    feats = feats * gamma_ref[...] + beta_ref[...]

    # active task head: Linear(D, Cp)   (classes zero-padded to Cp lanes)
    logits = jnp.dot(feats.astype(jnp.bfloat16), wh_ref[...],
                     preferred_element_type=jnp.float32) + bh_ref[...]
    o_ref[...] = logits.astype(o_ref.dtype)


# --------------------------------------------------------------------------- #
# Wrapper helpers
# --------------------------------------------------------------------------- #
def _round_up(n, m):
    return ((n + m - 1) // m) * m


class AdapterMeta(NamedTuple):
    D: int
    BN: int
    C: int
    BNp: int
    Cp: int


def prepare_params(params, *, weight_dtype=jnp.bfloat16):
    """One-time layout prep: pad bottleneck/class dims to 128 lanes, cast weights to bf16.

    Weights are expected pre-transposed so the kernel computes x @ W.
    """
    f32 = jnp.float32
    D = params["wb"].shape[0]
    BN = params["wd"].shape[1]
    C = params["wh"].shape[1]
    BNp = _round_up(BN, 128)
    Cp = _round_up(C, 128)

    prepared = {
        "wb": params["wb"].astype(weight_dtype),
        "bb": params["bb"].reshape(1, D).astype(f32),
        "wd": jnp.pad(params["wd"], ((0, 0), (0, BNp - BN))).astype(weight_dtype),
        "bd": jnp.pad(params["bd"].reshape(1, BN), ((0, 0), (0, BNp - BN))).astype(f32),
        "wu": jnp.pad(params["wu"], ((0, BNp - BN), (0, 0))).astype(weight_dtype),
        "bu": params["bu"].reshape(1, D).astype(f32),
        "gamma": params["gamma"].reshape(1, D).astype(f32),
        "beta": params["beta"].reshape(1, D).astype(f32),
        "wh": jnp.pad(params["wh"], ((0, 0), (0, Cp - C))).astype(weight_dtype),
        "bh": jnp.pad(params["bh"].reshape(1, C), ((0, 0), (0, Cp - C))).astype(f32),
    }
    return prepared, AdapterMeta(D=D, BN=BN, C=C, BNp=BNp, Cp=Cp)


def _tpu_vmem_and_cores():
    """Per-core VMEM bytes and a (heuristic) TensorCore count per chip."""
    try:
        info = pltpu.get_tpu_info()
        vmem = int(getattr(info, "vmem_capacity_bytes", 64 * 1024 * 1024))
    except Exception:
        vmem = 64 * 1024 * 1024            # conservative (v7x-sized) fallback
    # v7x has 64 MiB/TC and 2 TCs per chip; v5e/v6e have 128 MiB and a single TC.
    n_cores = 2 if vmem <= 96 * 1024 * 1024 else 1
    return vmem, n_cores


@functools.lru_cache(maxsize=None)
def _buffered_single_supported():
    """Probe once whether pipeline_mode=pl.Buffered(1) compiles on this build."""
    def _probe_kernel(c_ref, x_ref, o_ref):
        o_ref[...] = x_ref[...] + c_ref[...]

    try:
        probe = pl.pallas_call(
            _probe_kernel,
            out_shape=jax.ShapeDtypeStruct((256, 128), jnp.float32),
            grid_spec=pltpu.PrefetchScalarGridSpec(
                num_scalar_prefetch=0,
                grid=(2,),
                in_specs=[
                    pl.BlockSpec((1, 128), lambda i: (0, 0),
                                 pipeline_mode=pl.Buffered(1)),
                    pl.BlockSpec((128, 128), lambda i: (i, 0)),
                ],
                out_specs=pl.BlockSpec((128, 128), lambda i: (i, 0)),
            ),
        )
        jax.jit(probe).lower(
            jax.ShapeDtypeStruct((1, 128), jnp.float32),
            jax.ShapeDtypeStruct((256, 128), jnp.float32),
        ).compile()
        return True
    except Exception:
        return False


def _pick_tile_m(n_rows, d, bnp, cp, vmem_bytes, n_cores, resident_bytes):
    """Row tile: multiple of 128, sized against real per-core VMEM minus resident weights."""
    budget = vmem_bytes * 3 // 4 - resident_bytes
    budget = max(budget, 2 * 1024 * 1024)
    # Concurrent f32 live set per row: h/residual + y/feats + bottleneck d + logit acc,
    # plus double-buffered f32 x input tile and double-buffered output tile.
    bytes_per_row = 4 * (3 * d + bnp + cp) + 2 * 4 * d + 2 * 2 * cp
    tile = (budget // bytes_per_row // 128) * 128
    tile = max(128, min(1024, tile))
    # Keep >=2 grid steps per TensorCore when the row count allows (pipeline overlap;
    # on two-TC chips this also keeps both cores busy).
    min_steps = 2 * n_cores
    while tile > 128 and pl.cdiv(n_rows, tile) < min_steps:
        tile -= 128
    return tile


@functools.lru_cache(maxsize=None)
def _build_forward(grid_steps, tile_m, d, bnp, cp, out_dtype_name, vmem_limit,
                   single_buffer):
    """Build (and cache) the pallas_call for a given shape signature."""
    out_dtype = jnp.dtype(out_dtype_name)
    np_rows = grid_steps * tile_m

    def row_spec(width):
        return pl.BlockSpec((tile_m, width), lambda i: (i, 0))

    def const_spec(shape):
        # Constant-index residents: single buffer halves their VMEM footprint.
        if single_buffer:
            return pl.BlockSpec(shape, lambda i: (0, 0),
                                pipeline_mode=pl.Buffered(1))
        return pl.BlockSpec(shape, lambda i: (0, 0))

    flops = 2 * np_rows * d * (d + 2 * bnp + cp)
    bytes_accessed = (
        np_rows * d * 4                                 # x (f32 in)
        + np_rows * cp * out_dtype.itemsize             # logits out
        + (d * d + 2 * d * bnp + d * cp) * 2            # bf16 weights
        + (5 * d + bnp + cp) * 4)                       # f32 biases / affine
    cost = pl.CostEstimate(flops=flops, transcendentals=np_rows * bnp,
                           bytes_accessed=bytes_accessed)

    return pl.pallas_call(
        multitask_adapter_kernel,
        out_shape=jax.ShapeDtypeStruct((np_rows, cp), out_dtype),
        grid_spec=pltpu.PrefetchScalarGridSpec(
            num_scalar_prefetch=0,
            grid=(grid_steps,),
            in_specs=[
                row_spec(d),                 # x tile (f32)
                const_spec((d, d)),          # backbone weight (bf16)
                const_spec((1, d)),          # backbone bias
                const_spec((d, bnp)),        # down_proj weight (bf16)
                const_spec((1, bnp)),        # down_proj bias
                const_spec((bnp, d)),        # up_proj weight (bf16)
                const_spec((1, d)),          # up_proj bias
                const_spec((1, d)),          # layernorm gamma
                const_spec((1, d)),          # layernorm beta
                const_spec((d, cp)),         # head weight (bf16)
                const_spec((1, cp)),         # head bias
            ],
            out_specs=row_spec(cp),
        ),
        compiler_params=pltpu.CompilerParams(
            dimension_semantics=("parallel",),
            vmem_limit_bytes=vmem_limit,
        ),
        cost_estimate=cost,
    )


def multitask_adapter_forward(x, prepared, meta, *, tile_m=None,
                              out_dtype=jnp.bfloat16):
    """x: (B, S, D) float32.  prepared/meta: from prepare_params().  jit-friendly."""
    B, S, D = x.shape
    assert D == meta.D and D % 128 == 0, \
        "hidden size must be lane-dense (multiple of 128)"
    # TODO(synk): for D % 128 != 0, pad D and mask the LayerNorm reduction in-kernel.
    BNp, Cp, C = meta.BNp, meta.Cp, meta.C
    N = B * S

    vmem_bytes, n_cores = _tpu_vmem_and_cores()
    single_buffer = _buffered_single_supported()

    resident_bytes = sum(int(prepared[k].size) * prepared[k].dtype.itemsize
                         for k in ("wb", "wd", "wu", "wh", "bb", "bd", "bu",
                                   "gamma", "beta", "bh"))
    if not single_buffer:
        resident_bytes *= 2          # default double-buffering of the residents
    if resident_bytes > vmem_bytes // 2:
        # TODO(synk): K-tile the (D,D) backbone matmul (2-D grid rows x K, f32
        # accumulator scratch, pl.when init, 'arbitrary' K axis) once resident
        # weights exceed ~half the per-core VMEM (D >~ 3-4K on v7x, 5-6K on v5e/v6e).
        raise ValueError("resident adapter weights exceed the per-core VMEM budget; "
                         "K-tiled backbone path not implemented")

    if tile_m is None:
        tile_m = _pick_tile_m(N, D, BNp, Cp, vmem_bytes, n_cores, resident_bytes)
    assert tile_m % 128 == 0

    grid_steps = pl.cdiv(N, tile_m)
    if n_cores > 1 and grid_steps > 1:
        grid_steps = _round_up(grid_steps, n_cores)   # even grid for two-TC chips
    Np = grid_steps * tile_m

    vmem_limit = int(min(vmem_bytes * 4 // 5, 112 * 1024 * 1024))

    # x stays f32 at the boundary; the kernel casts to bf16 (halves x HBM traffic).
    x2 = x.reshape(N, D).astype(jnp.float32)
    if Np != N:
        x2 = jnp.pad(x2, ((0, Np - N), (0, 0)))

    fwd = _build_forward(grid_steps, tile_m, D, BNp, Cp,
                         jnp.dtype(out_dtype).name, vmem_limit, single_buffer)
    out = fwd(x2, prepared["wb"], prepared["bb"], prepared["wd"], prepared["bd"],
              prepared["wu"], prepared["bu"], prepared["gamma"], prepared["beta"],
              prepared["wh"], prepared["bh"])
    return out[:N, :C].reshape(B, S, C)


# --------------------------------------------------------------------------- #
# Pure-JAX reference (matches the kernel's bf16 MXU cast points, f32 math)
# --------------------------------------------------------------------------- #
def reference_forward(x, p):
    bf16 = jnp.bfloat16

    def mm(a, w):
        return jnp.dot(a.astype(bf16), w.astype(bf16),
                       preferred_element_type=jnp.float32)

    h = mm(x, p["wb"]) + p["bb"]
    d = mm(h, p["wd"]) + p["bd"]
    d = 0.5 * d * (1.0 + jax.lax.erf(d * jnp.float32(_SQRT_HALF)))
    u = mm(d, p["wu"]) + p["bu"]
    y = u + h
    mean = jnp.mean(y, axis=-1, keepdims=True)
    var = jnp.mean((y - mean) ** 2, axis=-1, keepdims=True)
    feats = (y - mean) / jnp.sqrt(var + _LN_EPS) * p["gamma"] + p["beta"]
    return mm(feats, p["wh"]) + p["bh"]


if __name__ == "__main__":
    # Small shapes consistent with the module: hidden_size=128 (backbone config,
    # lane-dense), bottleneck_size=64 (TaskAdapter default), num_classes=10.
    B, S, D, BN, C = 4, 128, 128, 64, 10

    key = jax.random.PRNGKey(0)
    kx, kwb, kbb, kwd, kbd, kwu, kbu, kwh = jax.random.split(key, 8)

    x = jax.random.normal(kx, (B, S, D), dtype=jnp.float32)

    # Weights pre-transposed so the kernel computes x @ W.
    params = {
        "wb": jax.random.normal(kwb, (D, D), dtype=jnp.float32) * 0.1,
        "bb": jax.random.normal(kbb, (1, D), dtype=jnp.float32) * 0.1,
        "wd": jax.random.normal(kwd, (D, BN), dtype=jnp.float32) * 0.1,
        "bd": jax.random.normal(kbd, (1, BN), dtype=jnp.float32) * 0.1,
        "wu": jax.random.normal(kwu, (BN, D), dtype=jnp.float32) * 0.1,
        "bu": jax.random.normal(kbu, (1, D), dtype=jnp.float32) * 0.1,
        "gamma": jnp.ones((1, D), dtype=jnp.float32),    # nn.LayerNorm defaults
        "beta": jnp.zeros((1, D), dtype=jnp.float32),
        "wh": jax.random.normal(kwh, (D, C), dtype=jnp.float32) * 0.1,  # xavier-ish
        "bh": jnp.zeros((1, C), dtype=jnp.float32),      # head bias init zeros
    }

    # One-time weight layout prep (padding + bf16 cast), done outside the hot path.
    prepared, meta = prepare_params(params)

    @jax.jit
    def fwd(x_in, prepared_in):
        return multitask_adapter_forward(x_in, prepared_in, meta)

    out = jax.block_until_ready(fwd(x, prepared))

    ref = reference_forward(x, params)
    assert out.shape == (B, S, C)
    out_f32 = out.astype(jnp.float32)
    assert jnp.allclose(out_f32, ref, atol=2e-2, rtol=2e-2), (
        "mismatch vs reference: max abs err = "
        f"{jnp.max(jnp.abs(out_f32 - ref)):.3e}")

    print("KERNEL_OK")
</pallas_src>

<mosaic_0001>
module attributes {stable_mosaic.version = 11 : i64} {
  func.func @multitask_adapter_kernel(%arg0: i32, %arg1: memref<128x128xf32, #tpu.memory_space<vmem>>, %arg2: memref<128x128xbf16, #tpu.memory_space<vmem>>, %arg3: memref<1x128xf32, #tpu.memory_space<vmem>>, %arg4: memref<128x128xbf16, #tpu.memory_space<vmem>>, %arg5: memref<1x128xf32, #tpu.memory_space<vmem>>, %arg6: memref<128x128xbf16, #tpu.memory_space<vmem>>, %arg7: memref<1x128xf32, #tpu.memory_space<vmem>>, %arg8: memref<1x128xf32, #tpu.memory_space<vmem>>, %arg9: memref<1x128xf32, #tpu.memory_space<vmem>>, %arg10: memref<128x128xbf16, #tpu.memory_space<vmem>>, %arg11: memref<1x128xf32, #tpu.memory_space<vmem>>, %arg12: memref<128x128xbf16, #tpu.memory_space<vmem>>) attributes {dimension_semantics = [#tpu.dimension_semantics<parallel>], iteration_bounds = array<i64: 4>, scalar_prefetch = 0 : i64, scratch_operands = 0 : i64, tpu.core_type = #tpu.core_type<tc>, window_params = [{transform_indices = @transform_0, window_bounds = array<i64: 128, 128>}, {pipeline_mode = #tpu.pipeline_mode<synchronous>, transform_indices = @transform_1, window_bounds = array<i64: 128, 128>}, {pipeline_mode = #tpu.pipeline_mode<synchronous>, transform_indices = @transform_2, window_bounds = array<i64: 1, 128>}, {pipeline_mode = #tpu.pipeline_mode<synchronous>, transform_indices = @transform_3, window_bounds = array<i64: 128, 128>}, {pipeline_mode = #tpu.pipeline_mode<synchronous>, transform_indices = @transform_4, window_bounds = array<i64: 1, 128>}, {pipeline_mode = #tpu.pipeline_mode<synchronous>, transform_indices = @transform_5, window_bounds = array<i64: 128, 128>}, {pipeline_mode = #tpu.pipeline_mode<synchronous>, transform_indices = @transform_6, window_bounds = array<i64: 1, 128>}, {pipeline_mode = #tpu.pipeline_mode<synchronous>, transform_indices = @transform_7, window_bounds = array<i64: 1, 128>}, {pipeline_mode = #tpu.pipeline_mode<synchronous>, transform_indices = @transform_8, window_bounds = array<i64: 1, 128>}, {pipeline_mode = #tpu.pipeline_mode<synchronous>, transform_indices = @transform_9, window_bounds = array<i64: 128, 128>}, {pipeline_mode = #tpu.pipeline_mode<synchronous>, transform_indices = @transform_10, window_bounds = array<i64: 1, 128>}, {transform_indices = @transform_11, window_bounds = array<i64: 128, 128>}]} {
    %c0 = arith.constant 0 : index
    %c0_0 = arith.constant 0 : index
    %0 = vector.load %arg1[%c0, %c0_0] : memref<128x128xf32, #tpu.memory_space<vmem>>, vector<128x128xf32>
    %1 = arith.truncf %0 : vector<128x128xf32> to vector<128x128xbf16>
    %c0_1 = arith.constant 0 : index
    %c0_2 = arith.constant 0 : index
    %2 = vector.load %arg2[%c0_1, %c0_2] : memref<128x128xbf16, #tpu.memory_space<vmem>>, vector<128x128xbf16>
    %cst = arith.constant dense<0.000000e+00> : vector<128x128xf32>
    %3 = tpu.matmul %1, %2, %cst {dimension_numbers = #tpu.dot_dimension_numbers<[1], [0], [0], [1], [0, 0, 1, 1], [], []>} : vector<128x128xbf16>, vector<128x128xbf16>, vector<128x128xf32> -> vector<128x128xf32>
    %c0_3 = arith.constant 0 : index
    %c0_4 = arith.constant 0 : index
    %4 = vector.load %arg3[%c0_3, %c0_4] : memref<1x128xf32, #tpu.memory_space<vmem>>, vector<1x128xf32>
    %5 = vector.broadcast %4 : vector<1x128xf32> to vector<128x128xf32>
    %6 = arith.addf %3, %5 : vector<128x128xf32>
    %7 = arith.truncf %6 : vector<128x128xf32> to vector<128x128xbf16>
    %c0_5 = arith.constant 0 : index
    %c0_6 = arith.constant 0 : index
    %8 = vector.load %arg4[%c0_5, %c0_6] : memref<128x128xbf16, #tpu.memory_space<vmem>>, vector<128x128xbf16>
    %cst_7 = arith.constant dense<0.000000e+00> : vector<128x128xf32>
    %9 = tpu.matmul %7, %8, %cst_7 {dimension_numbers = #tpu.dot_dimension_numbers<[1], [0], [0], [1], [0, 0, 1, 1], [], []>} : vector<128x128xbf16>, vector<128x128xbf16>, vector<128x128xf32> -> vector<128x128xf32>
    %c0_8 = arith.constant 0 : index
    %c0_9 = arith.constant 0 : index
    %10 = vector.load %arg5[%c0_8, %c0_9] : memref<1x128xf32, #tpu.memory_space<vmem>>, vector<1x128xf32>
    %11 = vector.broadcast %10 : vector<1x128xf32> to vector<128x128xf32>
    %12 = arith.addf %9, %11 : vector<128x128xf32>
    %cst_10 = arith.constant 5.000000e-01 : f32
    %13 = vector.broadcast %cst_10 : f32 to vector<128x128xf32>
    %14 = arith.mulf %13, %12 : vector<128x128xf32>
    %cst_11 = arith.constant 0.707106769 : f32
    %15 = vector.broadcast %cst_11 : f32 to vector<128x128xf32>
    %16 = arith.mulf %12, %15 : vector<128x128xf32>
    %17 = math.erf %16 : vector<128x128xf32>
    %cst_12 = arith.constant 1.000000e+00 : f32
    %18 = vector.broadcast %cst_12 : f32 to vector<128x128xf32>
    %19 = arith.addf %18, %17 : vector<128x128xf32>
    %20 = arith.mulf %14, %19 : vector<128x128xf32>
    %21 = arith.truncf %20 : vector<128x128xf32> to vector<128x128xbf16>
    %c0_13 = arith.constant 0 : index
    %c0_14 = arith.constant 0 : index
    %22 = vector.load %arg6[%c0_13, %c0_14] : memref<128x128xbf16, #tpu.memory_space<vmem>>, vector<128x128xbf16>
    %cst_15 = arith.constant dense<0.000000e+00> : vector<128x128xf32>
    %23 = tpu.matmul %21, %22, %cst_15 {dimension_numbers = #tpu.dot_dimension_numbers<[1], [0], [0], [1], [0, 0, 1, 1], [], []>} : vector<128x128xbf16>, vector<128x128xbf16>, vector<128x128xf32> -> vector<128x128xf32>
    %c0_16 = arith.constant 0 : index
    %c0_17 = arith.constant 0 : index
    %24 = vector.load %arg7[%c0_16, %c0_17] : memref<1x128xf32, #tpu.memory_space<vmem>>, vector<1x128xf32>
    %25 = vector.broadcast %24 : vector<1x128xf32> to vector<128x128xf32>
    %26 = arith.addf %23, %25 : vector<128x128xf32>
    %27 = arith.addf %26, %6 : vector<128x128xf32>
    %cst_18 = arith.constant dense<0.000000e+00> : vector<128xf32>
    %28 = vector.multi_reduction <add>, %27, %cst_18 [1] : vector<128x128xf32> to vector<128xf32>
    %29 = vector.shape_cast %28 : vector<128xf32> to vector<128x1xf32>
    %cst_19 = arith.constant 1.280000e+02 : f32
    %30 = vector.broadcast %cst_19 : f32 to vector<128x1xf32>
    %31 = arith.divf %29, %30 : vector<128x1xf32>
    %32 = vector.broadcast %31 : vector<128x1xf32> to vector<128x128xf32>
    %33 = arith.subf %27, %32 : vector<128x128xf32>
    %34 = arith.mulf %33, %33 : vector<128x128xf32>
    %cst_20 = arith.constant dense<0.000000e+00> : vector<128xf32>
    %35 = vector.multi_reduction <add>, %34, %cst_20 [1] : vector<128x128xf32> to vector<128xf32>
    %36 = vector.shape_cast %35 : vector<128xf32> to vector<128x1xf32>
    %cst_21 = arith.constant 1.280000e+02 : f32
    %37 = vector.broadcast %cst_21 : f32 to vector<128x1xf32>
    %38 = arith.divf %36, %37 : vector<128x1xf32>
    %cst_22 = arith.constant 9.99999974E-6 : f32
    %39 = vector.broadcast %cst_22 : f32 to vector<128x1xf32>
    %40 = arith.addf %38, %39 : vector<128x1xf32>
    %41 = math.rsqrt %40 : vector<128x1xf32>
    %42 = vector.broadcast %41 : vector<128x1xf32> to vector<128x128xf32>
    %43 = arith.mulf %33, %42 : vector<128x128xf32>
    %c0_23 = arith.constant 0 : index
    %c0_24 = arith.constant 0 : index
    %44 = vector.load %arg8[%c0_23, %c0_24] : memref<1x128xf32, #tpu.memory_space<vmem>>, vector<1x128xf32>
    %45 = vector.broadcast %44 : vector<1x128xf32> to vector<128x128xf32>
    %46 = arith.mulf %43, %45 : vector<128x128xf32>
    %c0_25 = arith.constant 0 : index
    %c0_26 = arith.constant 0 : index
    %47 = vector.load %arg9[%c0_25, %c0_26] : memref<1x128xf32, #tpu.memory_space<vmem>>, vector<1x128xf32>
    %48 = vector.broadcast %47 : vector<1x128xf32> to vector<128x128xf32>
    %49 = arith.addf %46, %48 : vector<128x128xf32>
    %50 = arith.truncf %49 : vector<128x128xf32> to vector<128x128xbf16>
    %c0_27 = arith.constant 0 : index
    %c0_28 = arith.constant 0 : index
    %51 = vector.load %arg10[%c0_27, %c0_28] : memref<128x128xbf16, #tpu.memory_space<vmem>>, vector<128x128xbf16>
    %cst_29 = arith.constant dense<0.000000e+00> : vector<128x128xf32>
    %52 = tpu.matmul %50, %51, %cst_29 {dimension_numbers = #tpu.dot_dimension_numbers<[1], [0], [0], [1], [0, 0, 1, 1], [], []>} : vector<128x128xbf16>, vector<128x128xbf16>, vector<128x128xf32> -> vector<128x128xf32>
    %c0_30 = arith.constant 0 : index
    %c0_31 = arith.constant 0 : index
    %53 = vector.load %arg11[%c0_30, %c0_31] : memref<1x128xf32, #tpu.memory_space<vmem>>, vector<1x128xf32>
    %54 = vector.broadcast %53 : vector<1x128xf32> to vector<128x128xf32>
    %55 = arith.addf %52, %54 : vector<128x128xf32>
    %56 = arith.truncf %55 : vector<128x128xf32> to vector<128x128xbf16>
    %c0_32 = arith.constant 0 : index
    %c0_33 = arith.constant 0 : index
    %57 = vector.load %arg12[%c0_32, %c0_33] : memref<128x128xbf16, #tpu.memory_space<vmem>>, vector<128x128xbf16>
    tpu.vector_store %arg12[%c0_32, %c0_33], %56 {strides = array<i32>} : memref<128x128xbf16, #tpu.memory_space<vmem>>, vector<128x128xbf16>,
    return
  }
  func.func @transform_0(%arg0: i32) -> (i32, i32) {
    %c0_i32 = arith.constant 0 : i32
    %c0_i32_0 = arith.constant 0 : i32
    return %arg0, %c0_i32 : i32, i32
  }
  func.func @transform_1(%arg0: i32) -> (i32, i32) {
    %c0_i32 = arith.constant 0 : i32
    %c0_i32_0 = arith.constant 0 : i32
    %c0_i32_1 = arith.constant 0 : i32
    return %c0_i32, %c0_i32_0 : i32, i32
  }
  func.func @transform_2(%arg0: i32) -> (i32, i32) {
    %c0_i32 = arith.constant 0 : i32
    %c0_i32_0 = arith.constant 0 : i32
    %c0_i32_1 = arith.constant 0 : i32
    return %c0_i32, %c0_i32_0 : i32, i32
  }
  func.func @transform_3(%arg0: i32) -> (i32, i32) {
    %c0_i32 = arith.constant 0 : i32
    %c0_i32_0 = arith.constant 0 : i32
    %c0_i32_1 = arith.constant 0 : i32
    return %c0_i32, %c0_i32_0 : i32, i32
  }
  func.func @transform_4(%arg0: i32) -> (i32, i32) {
    %c0_i32 = arith.constant 0 : i32
    %c0_i32_0 = arith.constant 0 : i32
    %c0_i32_1 = arith.constant 0 : i32
    return %c0_i32, %c0_i32_0 : i32, i32
  }
  func.func @transform_5(%arg0: i32) -> (i32, i32) {
    %c0_i32 = arith.constant 0 : i32
    %c0_i32_0 = arith.constant 0 : i32
    %c0_i32_1 = arith.constant 0 : i32
    return %c0_i32, %c0_i32_0 : i32, i32
  }
  func.func @transform_6(%arg0: i32) -> (i32, i32) {
    %c0_i32 = arith.constant 0 : i32
    %c0_i32_0 = arith.constant 0 : i32
    %c0_i32_1 = arith.constant 0 : i32
    return %c0_i32, %c0_i32_0 : i32, i32
  }
  func.func @transform_7(%arg0: i32) -> (i32, i32) {
    %c0_i32 = arith.constant 0 : i32
    %c0_i32_0 = arith.constant 0 : i32
    %c0_i32_1 = arith.constant 0 : i32
    return %c0_i32, %c0_i32_0 : i32, i32
  }
  func.func @transform_8(%arg0: i32) -> (i32, i32) {
    %c0_i32 = arith.constant 0 : i32
    %c0_i32_0 = arith.constant 0 : i32
    %c0_i32_1 = arith.constant 0 : i32
    return %c0_i32, %c0_i32_0 : i32, i32
  }
  func.func @transform_9(%arg0: i32) -> (i32, i32) {
    %c0_i32 = arith.constant 0 : i32
    %c0_i32_0 = arith.constant 0 : i32
    %c0_i32_1 = arith.constant 0 : i32
    return %c0_i32, %c0_i32_0 : i32, i32
  }
  func.func @transform_10(%arg0: i32) -> (i32, i32) {
    %c0_i32 = arith.constant 0 : i32
    %c0_i32_0 = arith.constant 0 : i32
    %c0_i32_1 = arith.constant 0 : i32
    return %c0_i32, %c0_i32_0 : i32, i32
  }
  func.func @transform_11(%arg0: i32) -> (i32, i32) {
    %c0_i32 = arith.constant 0 : i32
    %c0_i32_0 = arith.constant 0 : i32
    return %arg0, %c0_i32 : i32, i32
  }
}

</mosaic_0001>

<llo_original>
// kernel: fwd.1
$region0: #{fwd.1}
  #allocation0 [shape = 'u32[]', space=smem, size = 0x4, offset = 0x4, fixed_abs, tag = 'smem constant byte address 0x4 - core index']
  #allocation1 [shape = 'u32[72,128]{1,0:T(1,128)}', space=vmem, size = 0x9000, scoped, tag = 'internal scratch']
  %s0 = inlined_call_operand.hbm [shape: f32[512,128], index: 0, kind: input, shape index: {}]
  %s1 = inlined_call_operand.hbm [shape: bf16[128,128], index: 1, kind: input, shape index: {}]
  %s2 = inlined_call_operand.vmem [shape: f32[1,128], index: 2, kind: input, shape index: {}]
  %s3 = inlined_call_operand.hbm [shape: bf16[128,128], index: 3, kind: input, shape index: {}]
  %s4 = inlined_call_operand.vmem [shape: f32[1,128], index: 4, kind: input, shape index: {}]
  %s5 = inlined_call_operand.hbm [shape: bf16[128,128], index: 5, kind: input, shape index: {}]
  %s6 = inlined_call_operand.vmem [shape: f32[1,128], index: 6, kind: input, shape index: {}]
  %s7 = inlined_call_operand.vmem [shape: f32[1,128], index: 7, kind: input, shape index: {}]
  %s8 = inlined_call_operand.hbm [shape: f32[1,128], index: 8, kind: input, shape index: {}]
  %s9 = inlined_call_operand.hbm [shape: bf16[128,128], index: 9, kind: input, shape index: {}]
  %s10 = inlined_call_operand.hbm [shape: f32[1,128], index: 10, kind: input, shape index: {}]
  %s11 = inlined_call_operand.vmem [shape: bf16[512,128], index: 11, kind: output, shape index: {}]
  %s12 = sld [smem:[#allocation0]]
  $region105: #{fwd.1} parent=0
    _
  %s14 = ssub.s32 1, %s12
  %s15 = scalar_select 0, %s14, %s12
  $region1: #{fwd.1} parent=0
    #allocation2 [shape = 'u8[131072]{0}', space=vmem, size = 0x20000, scoped, tag = 'input window, operand 0']
    #allocation3 [shape = 's32[2]{0}', space=sflag, size = 0x8, scoped, tag = 'scoped memory for fwd.1']
    #allocation4 [shape = 'u8[32768]{0}', space=vmem, size = 0x8000, scoped, tag = 'input window, operand 1, single buffered']
    #allocation5 [shape = 's32[1]{0}', space=sflag, size = 0x4, scoped, tag = 'scoped memory for fwd.1']
    #allocation6 [shape = 'u8[32768]{0}', space=vmem, size = 0x8000, scoped, tag = 'input window, operand 3, single buffered']
    #allocation7 [shape = 'u8[32768]{0}', space=vmem, size = 0x8000, scoped, tag = 'input window, operand 5, single buffered']
    #allocation8 [shape = 's32[1]{0}', space=sflag, size = 0x4, scoped, tag = 'scoped memory for fwd.1']
    #allocation9 [shape = 'u8[512]{0}', space=vmem, size = 0x400, scoped, tag = 'input window, operand 8, single buffered']
    #allocation10 [shape = 'u8[32768]{0}', space=vmem, size = 0x8000, scoped, tag = 'input window, operand 9, single buffered']
    #allocation11 [shape = 's32[1]{0}', space=sflag, size = 0x4, scoped, tag = 'scoped memory for fwd.1']
    #allocation12 [shape = 'u8[512]{0}', space=vmem, size = 0x400, scoped, tag = 'input window, operand 10, single buffered']
    %16 = vsyncpa [#allocation3], 0
    %s17 = scalar_lea.sflag [#allocation3], 1
    %18 = vsyncpa %s17, 0
    %19 = vsyncpa [#allocation5], 0
    %20 = vsyncpa [#allocation8], 0
    %21 = vsyncpa [#allocation11], 0
    loop: start=0, step=1, limit=6
    $region2: #{fwd.1} parent=1 // loop_pre_header
      _
    $region3: #{fwd.1} parent=1 // loop_header
      %s23 = sphi 0, %s27
      %p24 = scmp.ge.s32.totalorder %s23, 6
      %s33 = sphi 0, %s35
      %s36 = sphi 0, %s33
      %s37 = sphi 0, %s36
      %s53 = sphi 0, %s37
      %s57 = sphi 0, %s57
      %s59 = sphi 0, %s57
      %s60 = sphi 0, %s59
      %s74 = sphi 0, %s60
      %s78 = sphi 0, %s78
      %s80 = sphi 0, %s78
      %s81 = sphi 0, %s80
      %s95 = sphi 0, %s81
      %s99 = sphi 0, %s99
      %s101 = sphi 0, %s99
      %s102 = sphi 0, %s101
      %s116 = sphi 0, %s102
      %s120 = sphi 0, %s120
      %s122 = sphi 0, %s120
      %s123 = sphi 0, %s122
      %s137 = sphi 0, %s123
      %s141 = sphi 0, %s141
      %s143 = sphi 0, %s141
      %s144 = sphi 0, %s143
      %s158 = sphi 0, %s144
      %s162 = sphi 0, %s162
      %s164 = sphi 0, %s162
      %s165 = sphi 0, %s164
      %s179 = sphi 0, %s165
      %s183 = sphi 0, %s183
      %s185 = sphi 0, %s183
      %s186 = sphi 0, %s185
      %s200 = sphi 0, %s186
      %s204 = sphi 0, %s204
      %s206 = sphi 0, %s204
      %s207 = sphi 0, %s206
      %s221 = sphi 0, %s207
      %s225 = sphi 0, %s225
      %s227 = sphi 0, %s225
      %s228 = sphi 0, %s227
      %s242 = sphi 0, %s228
      %s246 = sphi 0, %s246
      %s248 = sphi 0, %s246
      %s249 = sphi 0, %s248
      %s263 = sphi 0, %s249
      %s269 = sphi 0, %s271
      %s272 = sphi 0, %s269
      %s273 = sphi 0, %s272
      %s289 = sphi 0, %s273
    $region4: #{fwd.1} parent=1 // loop_header_branch
      %26 = sbr.rel (%p24) target = $region8
    $region5: #{fwd.1} parent=1 // loop_body
      %s28 = ssub.s32 %s23, 1
      %s29 = ssub.s32 %s23, 2
      %s30 = sadd.s32 %s23, 1
      %s31 = ssub.s32 %s23, %s30
      %p32 = scmp.eq.s32.totalorder %s31, 0
      %s34 = sadd.s32 %s33, 1
      %s35 = scalar_select %p32, %s33, %s34
      %p38 = pneg %p32
      %p39 = scmp.eq.s32.totalorder %s23, 3
      %p40 = por %p38, %p39
      %p41 = scmp.ne.s32.totalorder %s33, %s36
      %p42 = scmp.eq.s32.totalorder %s23, 0
      %p43 = por %p41, %p42
      %p44 = scmp.ne.s32.totalorder %s33, %s36
      %p45 = scmp.eq.s32.totalorder %s28, 3
      %p46 = por %p44, %p45
      %p47 = scmp.ne.s32.totalorder %s36, %s37
      %p48 = scmp.eq.s32.totalorder %s28, 0
      %p49 = por %p47, %p48
      %p50 = scmp.ne.s32.totalorder %s36, %s37
      %p51 = scmp.eq.s32.totalorder %s29, 3
      %p52 = por %p50, %p51
      %p54 = scmp.ne.s32.totalorder %s37, %s53
      %p55 = scmp.eq.s32.totalorder %s29, 0
      %p56 = por %p54, %p55
      %s58 = sadd.s32 %s57, 1
      %p61 = scmp.eq.s32.totalorder %s23, 3
      %p62 = scmp.ne.s32.totalorder %s57, %s59
      %p63 = scmp.eq.s32.totalorder %s23, 0
      %p64 = por %p62, %p63
      %p65 = scmp.ne.s32.totalorder %s57, %s59
      %p66 = scmp.eq.s32.totalorder %s28, 3
      %p67 = por %p65, %p66
      %p68 = scmp.ne.s32.totalorder %s59, %s60
      %p69 = scmp.eq.s32.totalorder %s28, 0
      %p70 = por %p68, %p69
      %p71 = scmp.ne.s32.totalorder %s59, %s60
      %p72 = scmp.eq.s32.totalorder %s29, 3
      %p73 = por %p71, %p72
      %p75 = scmp.ne.s32.totalorder %s60, %s74
      %p76 = scmp.eq.s32.totalorder %s29, 0
      %p77 = por %p75, %p76
      %s79 = sadd.s32 %s78, 1
      %p82 = scmp.eq.s32.totalorder %s23, 3
      %p83 = scmp.ne.s32.totalorder %s78, %s80
      %p84 = scmp.eq.s32.totalorder %s23, 0
      %p85 = por %p83, %p84
      %p86 = scmp.ne.s32.totalorder %s78, %s80
      %p87 = scmp.eq.s32.totalorder %s28, 3
      %p88 = por %p86, %p87
      %p89 = scmp.ne.s32.totalorder %s80, %s81
      %p90 = scmp.eq.s32.totalorder %s28, 0
      %p91 = por %p89, %p90
      %p92 = scmp.ne.s32.totalorder %s80, %s81
      %p93 = scmp.eq.s32.totalorder %s29, 3
      %p94 = por %p92, %p93
      %p96 = scmp.ne.s32.totalorder %s81, %s95
      %p97 = scmp.eq.s32.totalorder %s29, 0
      %p98 = por %p96, %p97
      %s100 = sadd.s32 %s99, 1
      %p103 = scmp.eq.s32.totalorder %s23, 3
      %p104 = scmp.ne.s32.totalorder %s99, %s101
      %p105 = scmp.eq.s32.totalorder %s23, 0
      %p106 = por %p104, %p105
      %p107 = scmp.ne.s32.totalorder %s99, %s101
      %p108 = scmp.eq.s32.totalorder %s28, 3
      %p109 = por %p107, %p108
      %p110 = scmp.ne.s32.totalorder %s101, %s102
      %p111 = scmp.eq.s32.totalorder %s28, 0
      %p112 = por %p110, %p111
      %p113 = scmp.ne.s32.totalorder %s101, %s102
      %p114 = scmp.eq.s32.totalorder %s29, 3
      %p115 = por %p113, %p114
      %p117 = scmp.ne.s32.totalorder %s102, %s116
      %p118 = scmp.eq.s32.totalorder %s29, 0
      %p119 = por %p117, %p118
      %s121 = sadd.s32 %s120, 1
      %p124 = scmp.eq.s32.totalorder %s23, 3
      %p125 = scmp.ne.s32.totalorder %s120, %s122
      %p126 = scmp.eq.s32.totalorder %s23, 0
      %p127 = por %p125, %p126
      %p128 = scmp.ne.s32.totalorder %s120, %s122
      %p129 = scmp.eq.s32.totalorder %s28, 3
      %p130 = por %p128, %p129
      %p131 = scmp.ne.s32.totalorder %s122, %s123
      %p132 = scmp.eq.s32.totalorder %s28, 0
      %p133 = por %p131, %p132
      %p134 = scmp.ne.s32.totalorder %s122, %s123
      %p135 = scmp.eq.s32.totalorder %s29, 3
      %p136 = por %p134, %p135
      %p138 = scmp.ne.s32.totalorder %s123, %s137
      %p139 = scmp.eq.s32.totalorder %s29, 0
      %p140 = por %p138, %p139
      %s142 = sadd.s32 %s141, 1
      %p145 = scmp.eq.s32.totalorder %s23, 3
      %p146 = scmp.ne.s32.totalorder %s141, %s143
      %p147 = scmp.eq.s32.totalorder %s23, 0
      %p148 = por %p146, %p147
      %p149 = scmp.ne.s32.totalorder %s141, %s143
      %p150 = scmp.eq.s32.totalorder %s28, 3
      %p151 = por %p149, %p150
      %p152 = scmp.ne.s32.totalorder %s143, %s144
      %p153 = scmp.eq.s32.totalorder %s28, 0
      %p154 = por %p152, %p153
      %p155 = scmp.ne.s32.totalorder %s143, %s144
      %p156 = scmp.eq.s32.totalorder %s29, 3
      %p157 = por %p155, %p156
      %p159 = scmp.ne.s32.totalorder %s144, %s158
      %p160 = scmp.eq.s32.totalorder %s29, 0
      %p161 = por %p159, %p160
      %s163 = sadd.s32 %s162, 1
      %p166 = scmp.eq.s32.totalorder %s23, 3
      %p167 = scmp.ne.s32.totalorder %s162, %s164
      %p168 = scmp.eq.s32.totalorder %s23, 0
      %p169 = por %p167, %p168
      %p170 = scmp.ne.s32.totalorder %s162, %s164
      %p171 = scmp.eq.s32.totalorder %s28, 3
      %p172 = por %p170, %p171
      %p173 = scmp.ne.s32.totalorder %s164, %s165
      %p174 = scmp.eq.s32.totalorder %s28, 0
      %p175 = por %p173, %p174
      %p176 = scmp.ne.s32.totalorder %s164, %s165
      %p177 = scmp.eq.s32.totalorder %s29, 3
      %p178 = por %p176, %p177
      %p180 = scmp.ne.s32.totalorder %s165, %s179
      %p181 = scmp.eq.s32.totalorder %s29, 0
      %p182 = por %p180, %p181
      %s184 = sadd.s32 %s183, 1
      %p187 = scmp.eq.s32.totalorder %s23, 3
      %p188 = scmp.ne.s32.totalorder %s183, %s185
      %p189 = scmp.eq.s32.totalorder %s23, 0
      %p190 = por %p188, %p189
      %p191 = scmp.ne.s32.totalorder %s183, %s185
      %p192 = scmp.eq.s32.totalorder %s28, 3
      %p193 = por %p191, %p192
      %p194 = scmp.ne.s32.totalorder %s185, %s186
      %p195 = scmp.eq.s32.totalorder %s28, 0
      %p196 = por %p194, %p195
      %p197 = scmp.ne.s32.totalorder %s185, %s186
      %p198 = scmp.eq.s32.totalorder %s29, 3
      %p199 = por %p197, %p198
      %p201 = scmp.ne.s32.totalorder %s186, %s200
      %p202 = scmp.eq.s32.totalorder %s29, 0
      %p203 = por %p201, %p202
      %s205 = sadd.s32 %s204, 1
      %p208 = scmp.eq.s32.totalorder %s23, 3
      %p209 = scmp.ne.s32.totalorder %s204, %s206
      %p210 = scmp.eq.s32.totalorder %s23, 0
      %p211 = por %p209, %p210
      %p212 = scmp.ne.s32.totalorder %s204, %s206
      %p213 = scmp.eq.s32.totalorder %s28, 3
      %p214 = por %p212, %p213
      %p215 = scmp.ne.s32.totalorder %s206, %s207
      %p216 = scmp.eq.s32.totalorder %s28, 0
      %p217 = por %p215, %p216
      %p218 = scmp.ne.s32.totalorder %s206, %s207
      %p219 = scmp.eq.s32.totalorder %s29, 3
      %p220 = por %p218, %p219
      %p222 = scmp.ne.s32.totalorder %s207, %s221
      %p223 = scmp.eq.s32.totalorder %s29, 0
      %p224 = por %p222, %p223
      %s226 = sadd.s32 %s225, 1
      %p229 = scmp.eq.s32.totalorder %s23, 3
      %p230 = scmp.ne.s32.totalorder %s225, %s227
      %p231 = scmp.eq.s32.totalorder %s23, 0
      %p232 = por %p230, %p231
      %p233 = scmp.ne.s32.totalorder %s225, %s227
      %p234 = scmp.eq.s32.totalorder %s28, 3
      %p235 = por %p233, %p234
      %p236 = scmp.ne.s32.totalorder %s227, %s228
      %p237 = scmp.eq.s32.totalorder %s28, 0
      %p238 = por %p236, %p237
      %p239 = scmp.ne.s32.totalorder %s227, %s228
      %p240 = scmp.eq.s32.totalorder %s29, 3
      %p241 = por %p239, %p240
      %p243 = scmp.ne.s32.totalorder %s228, %s242
      %p244 = scmp.eq.s32.totalorder %s29, 0
      %p245 = por %p243, %p244
      %s247 = sadd.s32 %s246, 1
      %p250 = scmp.eq.s32.totalorder %s23, 3
      %p251 = scmp.ne.s32.totalorder %s246, %s248
      %p252 = scmp.eq.s32.totalorder %s23, 0
      %p253 = por %p251, %p252
      %p254 = scmp.ne.s32.totalorder %s246, %s248
      %p255 = scmp.eq.s32.totalorder %s28, 3
      %p256 = por %p254, %p255
      %p257 = scmp.ne.s32.totalorder %s248, %s249
      %p258 = scmp.eq.s32.totalorder %s28, 0
      %p259 = por %p257, %p258
      %p260 = scmp.ne.s32.totalorder %s248, %s249
      %p261 = scmp.eq.s32.totalorder %s29, 3
      %p262 = por %p260, %p261
      %p264 = scmp.ne.s32.totalorder %s249, %s263
      %p265 = scmp.eq.s32.totalorder %s29, 0
      %p266 = por %p264, %p265
      %s267 = ssub.s32 %s23, %s30
      %p268 = scmp.eq.s32.totalorder %s267, 0
      %s270 = sadd.s32 %s269, 1
      %s271 = scalar_select %p268, %s269, %s270
      %p274 = pneg %p268
      %p275 = scmp.eq.s32.totalorder %s23, 3
      %p276 = por %p274, %p275
      %p277 = scmp.ne.s32.totalorder %s269, %s272
      %p278 = scmp.eq.s32.totalorder %s23, 0
      %p279 = por %p277, %p278
      %p280 = scmp.ne.s32.totalorder %s269, %s272
      %p281 = scmp.eq.s32.totalorder %s28, 3
      %p282 = por %p280, %p281
      %p283 = scmp.ne.s32.totalorder %s272, %s273
      %p284 = scmp.eq.s32.totalorder %s28, 0
      %p285 = por %p283, %p284
      %p286 = scmp.ne.s32.totalorder %s272, %s273
      %p287 = scmp.eq.s32.totalorder %s29, 3
      %p288 = por %p286, %p287
      %p290 = scmp.ne.s32.totalorder %s273, %s289
      %p291 = scmp.eq.s32.totalorder %s29, 0
      %p292 = por %p290, %p291
      %p293 = scmp.le.s32.totalorder 1, %s23
      %p294 = scmp.lt.s32.totalorder %s23, 5
      %p295 = pnand %p293, %p294
      %p296 = pneg %p295
      // Predicated region
      $region9: #{fwd.1} parent=5 // pred_check
        _
      $region10: #{fwd.1} parent=5 // pred_check_branch
        %298 = sbr.rel (%p295) target = $region12
      $region11: #{fwd.1} parent=5 // pred_region
        %s299 = ssub.s32 %s23, 1
        // Predicated region
        $region13: #{fwd.1} parent=11 // pred_check
          %p300 = pneg %p70
        $region14: #{fwd.1} parent=11 // pred_check_branch
          %302 = sbr.rel (%p300) target = $region16
        $region15: #{fwd.1} parent=11 // pred_region
          %304 = vsyncadd [#allocation5], 0
          %s305 = sshll.u32 %s1, 4
          %s306 = int_to_ptr.hbm [resolvable:$true] %s305
          %s307 = sshll.u32 [#allocation4], 4
          %s308 = int_to_ptr.vmem [resolvable:$true] %s307
          %313 = dma.hbm_to_vmem [thread:$0]  %s306, 1024, %s308, [#allocation5], 64, 64, 4
        $region16: #{fwd.1} parent=11 // pred_fallthru
          _
        // Predicated region
        $region17: #{fwd.1} parent=11 // pred_check
          %p314 = pneg %p91
        $region18: #{fwd.1} parent=11 // pred_check_branch
          %316 = sbr.rel (%p314) target = $region20
        $region19: #{fwd.1} parent=11 // pred_region
          _
        $region20: #{fwd.1} parent=11 // pred_fallthru
          _
        // Predicated region
        $region21: #{fwd.1} parent=11 // pred_check
          %p317 = pneg %p112
        $region22: #{fwd.1} parent=11 // pred_check_branch
          %319 = sbr.rel (%p317) target = $region24
        $region23: #{fwd.1} parent=11 // pred_region
          %321 = vsyncadd [#allocation5], 0
          %s322 = sshll.u32 %s3, 4
          %s323 = int_to_ptr.hbm [resolvable:$true] %s322
          %s324 = sshll.u32 [#allocation6], 4
          %s325 = int_to_ptr.vmem [resolvable:$true] %s324
          %330 = dma.hbm_to_vmem [thread:$0]  %s323, 1024, %s325, [#allocation5], 64, 64, 4
        $region24: #{fwd.1} parent=11 // pred_fallthru
          _
        // Predicated region
        $region25: #{fwd.1} parent=11 // pred_check
          %p331 = pneg %p133
        $region26: #{fwd.1} parent=11 // pred_check_branch
          %333 = sbr.rel (%p331) target = $region28
        $region27: #{fwd.1} parent=11 // pred_region
          _
        $region28: #{fwd.1} parent=11 // pred_fallthru
          _
        // Predicated region
        $region29: #{fwd.1} parent=11 // pred_check
          %p334 = pneg %p154
        $region30: #{fwd.1} parent=11 // pred_check_branch
          %336 = sbr.rel (%p334) target = $region32
        $region31: #{fwd.1} parent=11 // pred_region
          %338 = vsyncadd [#allocation8], 0
          %s339 = sshll.u32 %s5, 4
          %s340 = int_to_ptr.hbm [resolvable:$true] %s339
          %s341 = sshll.u32 [#allocation7], 4
          %s342 = int_to_ptr.vmem [resolvable:$true] %s341
          %347 = dma.hbm_to_vmem [thread:$0]  %s340, 1024, %s342, [#allocation8], 64, 64, 4
        $region32: #{fwd.1} parent=11 // pred_fallthru
          _
        // Predicated region
        $region33: #{fwd.1} parent=11 // pred_check
          %p348 = pneg %p175
        $region34: #{fwd.1} parent=11 // pred_check_branch
          %350 = sbr.rel (%p348) target = $region36
        $region35: #{fwd.1} parent=11 // pred_region
          _
        $region36: #{fwd.1} parent=11 // pred_fallthru
          _
        // Predicated region
        $region37: #{fwd.1} parent=11 // pred_check
          %p351 = pneg %p196
        $region38: #{fwd.1} parent=11 // pred_check_branch
          %353 = sbr.rel (%p351) target = $region40
        $region39: #{fwd.1} parent=11 // pred_region
          _
        $region40: #{fwd.1} parent=11 // pred_fallthru
          _
        // Predicated region
        $region41: #{fwd.1} parent=11 // pred_check
          %p354 = pneg %p217
        $region42: #{fwd.1} parent=11 // pred_check_branch
          %356 = sbr.rel (%p354) target = $region44
        $region43: #{fwd.1} parent=11 // pred_region
          %358 = vsyncadd [#allocation8], 0
          %s360 = sshll.u32 %s8, 4
          %s361 = int_to_ptr.hbm [resolvable:$true] %s360
          %s362 = sshll.u32 [#allocation9], 4
          %s363 = int_to_ptr.vmem [resolvable:$true] %s362
          %365 = dma.hbm_to_vmem [thread:$0]  %s361, 16, %s363, [#allocation8]
        $region44: #{fwd.1} parent=11 // pred_fallthru
          _
        // Predicated region
        $region45: #{fwd.1} parent=11 // pred_check
          %p366 = pneg %p238
        $region46: #{fwd.1} parent=11 // pred_check_branch
          %368 = sbr.rel (%p366) target = $region48
        $region47: #{fwd.1} parent=11 // pred_region
          %370 = vsyncadd [#allocation11], 0
          %s371 = sshll.u32 %s9, 4
          %s372 = int_to_ptr.hbm [resolvable:$true] %s371
          %s373 = sshll.u32 [#allocation10], 4
          %s374 = int_to_ptr.vmem [resolvable:$true] %s373
          %379 = dma.hbm_to_vmem [thread:$0]  %s372, 1024, %s374, [#allocation11], 64, 64, 4
        $region48: #{fwd.1} parent=11 // pred_fallthru
          _
        // Predicated region
        $region49: #{fwd.1} parent=11 // pred_check
          %p380 = pneg %p259
        $region50: #{fwd.1} parent=11 // pred_check_branch
          %382 = sbr.rel (%p380) target = $region52
        $region51: #{fwd.1} parent=11 // pred_region
          %384 = vsyncadd [#allocation11], 0
          %s386 = sshll.u32 %s10, 4
          %s387 = int_to_ptr.hbm [resolvable:$true] %s386
          %s388 = sshll.u32 [#allocation12], 4
          %s389 = int_to_ptr.vmem [resolvable:$true] %s388
          %391 = dma.hbm_to_vmem [thread:$0]  %s387, 16, %s389, [#allocation11]
        $region52: #{fwd.1} parent=11 // pred_fallthru
          _
      $region12: #{fwd.1} parent=5 // pred_fallthru
        _
      %p392 = scmp.lt.s32.totalorder %s23, 4
      // Predicated region
      $region53: #{fwd.1} parent=5 // pred_check
        %p393 = pneg %p392
      $region54: #{fwd.1} parent=5 // pred_check_branch
        %395 = sbr.rel (%p393) target = $region56
      $region55: #{fwd.1} parent=5 // pred_region
        // Predicated region
        $region57: #{fwd.1} parent=55 // pred_check
          %p396 = pneg %p43
        $region58: #{fwd.1} parent=55 // pred_check_branch
          %398 = sbr.rel (%p396) target = $region60
        $region59: #{fwd.1} parent=55 // pred_region
          %s399 = sand.u32 %s33, 1
          %s400 = scalar_lea.sflag [#allocation3], %s399
          %s401 = sand.u32 %s33, 1
          %s402 = smul.addr %s401, 128
          %s403 = scalar_lea.vmem [#allocation2], %s402
          %s404 = smul.u32 16, %s23
          %406 = vsyncadd %s400, 0
          %s407 = smul.addr %s404, 8
          %s408 = scalar_lea.hbm %s0, %s407
          %s409 = sshll.u32 %s408, 4
          %s410 = int_to_ptr.hbm [resolvable:$true] %s409
          %s411 = sshll.u32 %s403, 4
          %s412 = int_to_ptr.vmem [resolvable:$true] %s411
          %417 = dma.hbm_to_vmem [thread:$0]  %s410, 2048, %s412, %s400, 128, 128, 8
        $region60: #{fwd.1} parent=55 // pred_fallthru
          _
      $region56: #{fwd.1} parent=5 // pred_fallthru
        _
      %p418 = scmp.le.s32.totalorder 1, %s23
      %p419 = scmp.lt.s32.totalorder %s23, 5
      %p420 = pnand %p418, %p419
      %p421 = pneg %p420
      // Predicated region
      $region61: #{fwd.1} parent=5 // pred_check
        _
      $region62: #{fwd.1} parent=5 // pred_check_branch
        %423 = sbr.rel (%p420) target = $region64
      $region63: #{fwd.1} parent=5 // pred_region
        %s424 = ssub.s32 %s23, 1
        %s425 = sand.u32 %s36, 1
        %s426 = scalar_lea.sflag [#allocation3], %s425
        %s427 = sand.u32 %s36, 1
        %s428 = smul.addr %s427, 128
        %s429 = scalar_lea.vmem [#allocation2], %s428
        // Predicated region
        $region65: #{fwd.1} parent=63 // pred_check
          %p430 = pneg %p49
        $region66: #{fwd.1} parent=63 // pred_check_branch
          %432 = sbr.rel (%p430) target = $region68
        $region67: #{fwd.1} parent=63 // pred_region
          %434 = dma.done %s426, 2048
        $region68: #{fwd.1} parent=63 // pred_fallthru
          _
        // Predicated region
        $region69: #{fwd.1} parent=63 // pred_check
          %p435 = pneg %p70
        $region70: #{fwd.1} parent=63 // pred_check_branch
          %437 = sbr.rel (%p435) target = $region72
        $region71: #{fwd.1} parent=63 // pred_region
          %439 = dma.done [#allocation5], 1024
        $region72: #{fwd.1} parent=63 // pred_fallthru
          _
        // Predicated region
        $region73: #{fwd.1} parent=63 // pred_check
          %p440 = pneg %p112
        $region74: #{fwd.1} parent=63 // pred_check_branch
          %442 = sbr.rel (%p440) target = $region76
        $region75: #{fwd.1} parent=63 // pred_region
          %444 = dma.done [#allocation5], 1024
        $region76: #{fwd.1} parent=63 // pred_fallthru
          _
        // Predicated region
        $region77: #{fwd.1} parent=63 // pred_check
          %p445 = pneg %p154
        $region78: #{fwd.1} parent=63 // pred_check_branch
          %447 = sbr.rel (%p445) target = $region80
        $region79: #{fwd.1} parent=63 // pred_region
          %449 = dma.done [#allocation8], 1024
        $region80: #{fwd.1} parent=63 // pred_fallthru
          _
        // Predicated region
        $region81: #{fwd.1} parent=63 // pred_check
          %p450 = pneg %p217
        $region82: #{fwd.1} parent=63 // pred_check_branch
          %452 = sbr.rel (%p450) target = $region84
        $region83: #{fwd.1} parent=63 // pred_region
          %454 = dma.done [#allocation8], 16
        $region84: #{fwd.1} parent=63 // pred_fallthru
          _
        // Predicated region
        $region85: #{fwd.1} parent=63 // pred_check
          %p455 = pneg %p238
        $region86: #{fwd.1} parent=63 // pred_check_branch
          %457 = sbr.rel (%p455) target = $region88
        $region87: #{fwd.1} parent=63 // pred_region
          %459 = dma.done [#allocation11], 1024
        $region88: #{fwd.1} parent=63 // pred_fallthru
          _
        // Predicated region
        $region89: #{fwd.1} parent=63 // pred_check
          %p460 = pneg %p259
        $region90: #{fwd.1} parent=63 // pred_check_branch
          %462 = sbr.rel (%p460) target = $region92
        $region91: #{fwd.1} parent=63 // pred_region
          %464 = dma.done [#allocation11], 16
        $region92: #{fwd.1} parent=63 // pred_fallthru
          _
        %s465 = sand.u32 %s36, 1
        %s466 = scalar_lea.sflag [#allocation3], %s465
        %s467 = sand.u32 %s36, 1
        %s468 = smul.addr %s467, 128
        %s469 = scalar_lea.vmem [#allocation2], %s468
        %p470 = pneg %p49
        %p471 = pneg %p46
        %p472 = pneg %p70
        %p473 = pneg %p67
        %p474 = pneg %p91
        %p475 = pneg %p88
        %p476 = pneg %p112
        %p477 = pneg %p109
        %p478 = pneg %p133
        %p479 = pneg %p130
        %p480 = pneg %p154
        %p481 = pneg %p151
        %p482 = pneg %p175
        %p483 = pneg %p172
        %p484 = pneg %p196
        %p485 = pneg %p193
        %p486 = pneg %p217
        %p487 = pneg %p214
        %p488 = pneg %p238
        %p489 = pneg %p235
        %p490 = pneg %p259
        %p491 = pneg %p256
        %p492 = pneg %p285
        %p493 = pneg %p282
        %s494 = smul.u32 16, %s28
        %p495 = scmp.lt.s32.totalorder %s494, 63
        %s496 = scalar_select %p495, %s494, 63
        %s497 = smul.addr %s496, 4
        %s498 = scalar_lea.vmem %s11, %s497
        %s499 = smul.u32 16, %s28
        %s500 = smul.u32 16, %s28
        %p501 = scmp.lt.s32.totalorder %s500, 63
        %s502 = scalar_select %p501, %s500, 63
        %s503 = smul.addr %s502, 4
        %s504 = scalar_lea.vmem %s11, %s503
        %s505 = smul.u32 16, %s28
        %v506 = vld [vmem:[%s429] sm:$0xff]
        %v507 = vld [vmem:[%s429 + $0x8] sm:$0xff]
        %v508 = vld [vmem:[%s429 + $0x10] sm:$0xff]
        %v509 = vld [vmem:[%s429 + $0x18] sm:$0xff]
        %v510 = vld [vmem:[%s429 + $0x20] sm:$0xff]
        %v511 = vld [vmem:[%s429 + $0x28] sm:$0xff]
        %v512 = vld [vmem:[%s429 + $0x30] sm:$0xff]
        %v513 = vld [vmem:[%s429 + $0x38] sm:$0xff]
        %v514 = vld [vmem:[%s429 + $0x40] sm:$0xff]
        %v515 = vld [vmem:[%s429 + $0x48] sm:$0xff]
        %v516 = vld [vmem:[%s429 + $0x50] sm:$0xff]
        %v517 = vld [vmem:[%s429 + $0x58] sm:$0xff]
        %v518 = vld [vmem:[%s429 + $0x60] sm:$0xff]
        %v519 = vld [vmem:[%s429 + $0x68] sm:$0xff]
        %v520 = vld [vmem:[%s429 + $0x70] sm:$0xff]
        %v521 = vld [vmem:[%s429 + $0x78] sm:$0xff]
        %v522 = vpack.c.bf16 %v507, %v506
        %v523 = vpack.c.bf16 %v509, %v508
        %v524 = vpack.c.bf16 %v511, %v510
        %v525 = vpack.c.bf16 %v513, %v512
        %v526 = vpack.c.bf16 %v515, %v514
        %v527 = vpack.c.bf16 %v517, %v516
        %v528 = vpack.c.bf16 %v519, %v518
        %v529 = vpack.c.bf16 %v521, %v520
        %v530 = vld [vmem:[#allocation4] sm:$0xf]
        %v531 = vld [vmem:[#allocation4 + $0x4] sm:$0xf]
        %v532 = vld [vmem:[#allocation4 + $0x8] sm:$0xf]
        %v533 = vld [vmem:[#allocation4 + $0xc] sm:$0xf]
        %v534 = vld [vmem:[#allocation4 + $0x10] sm:$0xf]
        %v535 = vld [vmem:[#allocation4 + $0x14] sm:$0xf]
        %v536 = vld [vmem:[#allocation4 + $0x18] sm:$0xf]
        %v537 = vld [vmem:[#allocation4 + $0x1c] sm:$0xf]
        %v538 = vld [vmem:[#allocation4 + $0x20] sm:$0xf]
        %v539 = vld [vmem:[#allocation4 + $0x24] sm:$0xf]
        %v540 = vld [vmem:[#allocation4 + $0x28] sm:$0xf]
        %v541 = vld [vmem:[#allocation4 + $0x2c] sm:$0xf]
        %v542 = vld [vmem:[#allocation4 + $0x30] sm:$0xf]
        %v543 = vld [vmem:[#allocation4 + $0x34] sm:$0xf]
        %v544 = vld [vmem:[#allocation4 + $0x38] sm:$0xf]
        %v545 = vld [vmem:[#allocation4 + $0x3c] sm:$0xf]
        %v546 = vld [vmem:[%s2] sm:$0x1]
        %v548 = vperm.slane %v546, 0
        %v566 = vunpack.c.l.b16 %v530
        %v567 = vunpack.c.l.b16 %v531
        %v568 = vunpack.c.l.b16 %v532
        %v569 = vunpack.c.l.b16 %v533
        %v570 = vunpack.c.l.b16 %v534
        %v571 = vunpack.c.l.b16 %v535
        %v572 = vunpack.c.l.b16 %v536
        %v573 = vunpack.c.l.b16 %v537
        %v574 = vunpack.c.l.b16 %v538
        %v575 = vunpack.c.l.b16 %v539
        %v576 = vunpack.c.l.b16 %v540
        %v577 = vunpack.c.l.b16 %v541
        %v578 = vunpack.c.l.b16 %v542
        %v579 = vunpack.c.l.b16 %v543
        %v580 = vunpack.c.l.b16 %v544
        %v581 = vunpack.c.l.b16 %v545
        %v582 = vpack.c.b16 %v567, %v566
        %v583 = vpack.c.b16 %v569, %v568
        %v584 = vpack.c.b16 %v571, %v570
        %v585 = vpack.c.b16 %v573, %v572
        %v586 = vpack.c.b16 %v575, %v574
        %v587 = vpack.c.b16 %v577, %v576
        %v588 = vpack.c.b16 %v579, %v578
        %v589 = vpack.c.b16 %v581, %v580
        %598 = vmatpush.bf16.msra.mxu0 %v589
        %599 = vmatpush.bf16.msra.mxu0 %v588
        %600 = vmatpush.bf16.msra.mxu0 %v587
        %601 = vmatpush.bf16.msra.mxu0 %v586
        %602 = vmatpush.bf16.msra.mxu0 %v585
        %603 = vmatpush.bf16.msra.mxu0 %v584
        %604 = vmatpush.bf16.msra.mxu0 %v583
        %605 = vmatpush.bf16.msra.mxu0 %v582
        %606 = vmatmul.bf16.gmra.mxu0 %v522
        %v607 = vpop.f32.mrf.mxu0
        %v608 = vadd.f32 %v548, %v607
        %v609 = vpop.f32.mrf.mxu0
        %v610 = vadd.f32 %v548, %v609
        %611 = vmatmul.bf16.gmra.mxu0 %v523
        %v612 = vpop.f32.mrf.mxu0
        %v613 = vadd.f32 %v548, %v612
        %v614 = vpop.f32.mrf.mxu0
        %v615 = vadd.f32 %v548, %v614
        %616 = vmatmul.bf16.gmra.mxu0 %v524
        %v617 = vpop.f32.mrf.mxu0
        %v618 = vadd.f32 %v548, %v617
        %v619 = vpop.f32.mrf.mxu0
        %v620 = vadd.f32 %v548, %v619
        %621 = vmatmul.bf16.gmra.mxu0 %v525
        %v622 = vpop.f32.mrf.mxu0
        %v623 = vadd.f32 %v548, %v622
        %v624 = vpop.f32.mrf.mxu0
        %v625 = vadd.f32 %v548, %v624
        %626 = vmatmul.bf16.gmra.mxu0 %v526
        %v627 = vpop.f32.mrf.mxu0
        %v628 = vadd.f32 %v548, %v627
        %v629 = vpop.f32.mrf.mxu0
        %v630 = vadd.f32 %v548, %v629
        %631 = vmatmul.bf16.gmra.mxu0 %v527
        %v632 = vpop.f32.mrf.mxu0
        %v633 = vadd.f32 %v548, %v632
        %v634 = vpop.f32.mrf.mxu0
        %v635 = vadd.f32 %v548, %v634
        %636 = vmatmul.bf16.gmra.mxu0 %v528
        %v637 = vpop.f32.mrf.mxu0
        %v638 = vadd.f32 %v548, %v637
        %v639 = vpop.f32.mrf.mxu0
        %v640 = vadd.f32 %v548, %v639
        %641 = vmatmul.bf16.gmra.mxu0 %v529
        %v642 = vpop.f32.mrf.mxu0
        %v643 = vadd.f32 %v548, %v642
        %v644 = vpop.f32.mrf.mxu0
        %v645 = vadd.f32 %v548, %v644
        %646 = vdwg.mxu0
        %v647 = vpack.c.bf16 %v610, %v608
        %v648 = vpack.c.bf16 %v615, %v613
        %v649 = vpack.c.bf16 %v620, %v618
        %v650 = vpack.c.bf16 %v625, %v623
        %v651 = vpack.c.bf16 %v630, %v628
        %v652 = vpack.c.bf16 %v635, %v633
        %v653 = vpack.c.bf16 %v640, %v638
        %v654 = vpack.c.bf16 %v645, %v643
        %v655 = vld [vmem:[#allocation6] sm:$0xf]
        %v656 = vld [vmem:[#allocation6 + $0x4] sm:$0xf]
        %v657 = vld [vmem:[#allocation6 + $0x8] sm:$0xf]
        %v658 = vld [vmem:[#allocation6 + $0xc] sm:$0xf]
        %v659 = vld [vmem:[#allocation6 + $0x10] sm:$0xf]
        %v660 = vld [vmem:[#allocation6 + $0x14] sm:$0xf]
        %v661 = vld [vmem:[#allocation6 + $0x18] sm:$0xf]
        %v662 = vld [vmem:[#allocation6 + $0x1c] sm:$0xf]
        %v663 = vld [vmem:[#allocation6 + $0x20] sm:$0xf]
        %v664 = vld [vmem:[#allocation6 + $0x24] sm:$0xf]
        %v665 = vld [vmem:[#allocation6 + $0x28] sm:$0xf]
        %v666 = vld [vmem:[#allocation6 + $0x2c] sm:$0xf]
        %v667 = vld [vmem:[#allocation6 + $0x30] sm:$0xf]
        %v668 = vld [vmem:[#allocation6 + $0x34] sm:$0xf]
        %v669 = vld [vmem:[#allocation6 + $0x38] sm:$0xf]
        %v670 = vld [vmem:[#allocation6 + $0x3c] sm:$0xf]
        %v671 = vld [vmem:[%s4] sm:$0x1]
        %v673 = vperm.slane %v671, 0
        %v691 = vunpack.c.l.b16 %v655
        %v692 = vunpack.c.l.b16 %v656
        %v693 = vunpack.c.l.b16 %v657
        %v694 = vunpack.c.l.b16 %v658
        %v695 = vunpack.c.l.b16 %v659
        %v696 = vunpack.c.l.b16 %v660
        %v697 = vunpack.c.l.b16 %v661
        %v698 = vunpack.c.l.b16 %v662
        %v699 = vunpack.c.l.b16 %v663
        %v700 = vunpack.c.l.b16 %v664
        %v701 = vunpack.c.l.b16 %v665
        %v702 = vunpack.c.l.b16 %v666
        %v703 = vunpack.c.l.b16 %v667
        %v704 = vunpack.c.l.b16 %v668
        %v705 = vunpack.c.l.b16 %v669
        %v706 = vunpack.c.l.b16 %v670
        %v707 = vpack.c.b16 %v692, %v691
        %v708 = vpack.c.b16 %v694, %v693
        %v709 = vpack.c.b16 %v696, %v695
        %v710 = vpack.c.b16 %v698, %v697
        %v711 = vpack.c.b16 %v700, %v699
        %v712 = vpack.c.b16 %v702, %v701
        %v713 = vpack.c.b16 %v704, %v703
        %v714 = vpack.c.b16 %v706, %v705
        %723 = vmatpush.bf16.msra.mxu0 %v714
        %724 = vmatpush.bf16.msra.mxu0 %v713
        %725 = vmatpush.bf16.msra.mxu0 %v712
        %726 = vmatpush.bf16.msra.mxu0 %v711
        %727 = vmatpush.bf16.msra.mxu0 %v710
        %728 = vmatpush.bf16.msra.mxu0 %v709
        %729 = vmatpush.bf16.msra.mxu0 %v708
        %730 = vmatpush.bf16.msra.mxu0 %v707
        %731 = vmatmul.bf16.gmra.mxu0 %v647
        %v732 = vpop.f32.mrf.mxu0
        %v733 = vadd.f32 %v673, %v732
        %v734 = vpop.f32.mrf.mxu0
        %v735 = vadd.f32 %v673, %v734
        %736 = vmatmul.bf16.gmra.mxu0 %v648
        %v737 = vpop.f32.mrf.mxu0
        %v738 = vadd.f32 %v673, %v737
        %v739 = vpop.f32.mrf.mxu0
        %v740 = vadd.f32 %v673, %v739
        %741 = vmatmul.bf16.gmra.mxu0 %v649
        %v742 = vpop.f32.mrf.mxu0
        %v743 = vadd.f32 %v673, %v742
        %v744 = vpop.f32.mrf.mxu0
        %v745 = vadd.f32 %v673, %v744
        %746 = vmatmul.bf16.gmra.mxu0 %v650
        %v747 = vpop.f32.mrf.mxu0
        %v748 = vadd.f32 %v673, %v747
        %v749 = vpop.f32.mrf.mxu0
        %v750 = vadd.f32 %v673, %v749
        %751 = vmatmul.bf16.gmra.mxu0 %v651
        %v752 = vpop.f32.mrf.mxu0
        %v753 = vadd.f32 %v673, %v752
        %v754 = vpop.f32.mrf.mxu0
        %v755 = vadd.f32 %v673, %v754
        %756 = vmatmul.bf16.gmra.mxu0 %v652
        %v757 = vpop.f32.mrf.mxu0
        %v758 = vadd.f32 %v673, %v757
        %v759 = vpop.f32.mrf.mxu0
        %v760 = vadd.f32 %v673, %v759
        %761 = vmatmul.bf16.gmra.mxu0 %v653
        %v762 = vpop.f32.mrf.mxu0
        %v763 = vadd.f32 %v673, %v762
        %v764 = vpop.f32.mrf.mxu0
        %v765 = vadd.f32 %v673, %v764
        %766 = vmatmul.bf16.gmra.mxu0 %v654
        %v767 = vpop.f32.mrf.mxu0
        %v768 = vadd.f32 %v673, %v767
        %v769 = vpop.f32.mrf.mxu0
        %v770 = vadd.f32 %v673, %v769
        %771 = vdwg.mxu0
        %v772 = vmul.f32 %v733, 0.5
        %v773 = vmul.f32 %v735, 0.5
        %v774 = vmul.f32 %v738, 0.5
        %v775 = vmul.f32 %v740, 0.5
        %v776 = vmul.f32 %v743, 0.5
        %v777 = vmul.f32 %v745, 0.5
        %v778 = vmul.f32 %v748, 0.5
        %v779 = vmul.f32 %v750, 0.5
        %v780 = vmul.f32 %v753, 0.5
        %v781 = vmul.f32 %v755, 0.5
        %v782 = vmul.f32 %v758, 0.5
        %v783 = vmul.f32 %v760, 0.5
        %v784 = vmul.f32 %v763, 0.5
        %v785 = vmul.f32 %v765, 0.5
        %v786 = vmul.f32 %v768, 0.5
        %v787 = vmul.f32 %v770, 0.5
        %v788 = vmul.f32 %v733, 0.70710677
        %v789 = vmul.f32 %v735, 0.70710677
        %v790 = vmul.f32 %v738, 0.70710677
        %v791 = vmul.f32 %v740, 0.70710677
        %v792 = vmul.f32 %v743, 0.70710677
        %v793 = vmul.f32 %v745, 0.70710677
        %v794 = vmul.f32 %v748, 0.70710677
        %v795 = vmul.f32 %v750, 0.70710677
        %v796 = vmul.f32 %v753, 0.70710677
        %v797 = vmul.f32 %v755, 0.70710677
        %v798 = vmul.f32 %v758, 0.70710677
        %v799 = vmul.f32 %v760, 0.70710677
        %v800 = vmul.f32 %v763, 0.70710677
        %v801 = vmul.f32 %v765, 0.70710677
        %v802 = vmul.f32 %v768, 0.70710677
        %v803 = vmul.f32 %v770, 0.70710677
        %v804 = vmul.f32 %v788, %v788
        %v805 = vmin.f32 16.0, %v804
        %v806 = vmul.f32 %v805, 2.1237322e-06
        %v807 = vadd.f32 %v806, 0.00028619796
        %v808 = vmul.f32 %v805, %v807
        %v809 = vadd.f32 %v808, 0.0036580483
        %v810 = vmul.f32 %v805, %v809
        %v811 = vadd.f32 %v810, 0.05243302
        %v812 = vmul.f32 %v805, %v811
        %v813 = vadd.f32 %v812, 0.18741608
        %v814 = vmul.f32 %v805, %v813
        %v815 = vadd.f32 %v814, 1.1283791
        %v816 = vmul.f32 %v788, %v815
        %v817 = vmul.f32 %v805, 3.8918573e-05
        %v818 = vadd.f32 %v817, 0.001143296
        %v819 = vmul.f32 %v805, %v818
        %v820 = vadd.f32 %v819, 0.014752088
        %v821 = vmul.f32 %v805, %v820
        %v822 = vadd.f32 %v821, 0.112945676
        %v823 = vmul.f32 %v805, %v822
        %v824 = vadd.f32 %v823, 0.4994258
        %v825 = vmul.f32 %v805, %v824
        %v826 = vadd.f32 %v825, 1.0
        %v827 = vrcp.pop %v826
        %v828 = vmul.f32 %v826, %v827
        %v829 = vsub.f32 1.0, %v828
        %v830 = vmul.f32 %v827, %v829
        %v831 = vadd.f32 %v827, %v830
        %vm832 = vweird.f32 %v826
        %vm833 = vweird.f32 %v827
        %vm834 = vmor %vm832, %vm833
        %v835 = vsel %vm834, %v827, %v831
        %v836 = vand.u32 2147483647, %v826
        %vm837 = vcmp.eq.f32.partialorder %v836, 8.507059e+37
        %v838 = vand.u32 %v826, 2147483648
        %v839 = vor.u32 1.1754944e-38, %v838
        %v840 = vsel %vm837, %v839, %v835
        %v841 = vmul.f32 %v816, %v840
        %v842 = vmin.f32 %v841, 1.0
        %v843 = vmax.f32 %v842, -1.0
        %v844 = vmul.f32 %v789, %v789
        %v845 = vmin.f32 16.0, %v844
        %v846 = vmul.f32 %v845, 2.1237322e-06
        %v847 = vadd.f32 %v846, 0.00028619796
        %v848 = vmul.f32 %v845, %v847
        %v849 = vadd.f32 %v848, 0.0036580483
        %v850 = vmul.f32 %v845, %v849
        %v851 = vadd.f32 %v850, 0.05243302
        %v852 = vmul.f32 %v845, %v851
        %v853 = vadd.f32 %v852, 0.18741608
        %v854 = vmul.f32 %v845, %v853
        %v855 = vadd.f32 %v854, 1.1283791
        %v856 = vmul.f32 %v789, %v855
        %v857 = vmul.f32 %v845, 3.8918573e-05
        %v858 = vadd.f32 %v857, 0.001143296
        %v859 = vmul.f32 %v845, %v858
        %v860 = vadd.f32 %v859, 0.014752088
        %v861 = vmul.f32 %v845, %v860
        %v862 = vadd.f32 %v861, 0.112945676
        %v863 = vmul.f32 %v845, %v862
        %v864 = vadd.f32 %v863, 0.4994258
        %v865 = vmul.f32 %v845, %v864
        %v866 = vadd.f32 %v865, 1.0
        %v867 = vrcp.pop %v866
        %v868 = vmul.f32 %v866, %v867
        %v869 = vsub.f32 1.0, %v868
        %v870 = vmul.f32 %v867, %v869
        %v871 = vadd.f32 %v867, %v870
        %vm872 = vweird.f32 %v866
        %vm873 = vweird.f32 %v867
        %vm874 = vmor %vm872, %vm873
        %v875 = vsel %vm874, %v867, %v871
        %v876 = vand.u32 2147483647, %v866
        %vm877 = vcmp.eq.f32.partialorder %v876, 8.507059e+37
        %v878 = vand.u32 %v866, 2147483648
        %v879 = vor.u32 1.1754944e-38, %v878
        %v880 = vsel %vm877, %v879, %v875
        %v881 = vmul.f32 %v856, %v880
        %v882 = vmin.f32 %v881, 1.0
        %v883 = vmax.f32 %v882, -1.0
        %v884 = vmul.f32 %v790, %v790
        %v885 = vmin.f32 16.0, %v884
        %v886 = vmul.f32 %v885, 2.1237322e-06
        %v887 = vadd.f32 %v886, 0.00028619796
        %v888 = vmul.f32 %v885, %v887
        %v889 = vadd.f32 %v888, 0.0036580483
        %v890 = vmul.f32 %v885, %v889
        %v891 = vadd.f32 %v890, 0.05243302
        %v892 = vmul.f32 %v885, %v891
        %v893 = vadd.f32 %v892, 0.18741608
        %v894 = vmul.f32 %v885, %v893
        %v895 = vadd.f32 %v894, 1.1283791
        %v896 = vmul.f32 %v790, %v895
        %v897 = vmul.f32 %v885, 3.8918573e-05
        %v898 = vadd.f32 %v897, 0.001143296
        %v899 = vmul.f32 %v885, %v898
        %v900 = vadd.f32 %v899, 0.014752088
        %v901 = vmul.f32 %v885, %v900
        %v902 = vadd.f32 %v901, 0.112945676
        %v903 = vmul.f32 %v885, %v902
        %v904 = vadd.f32 %v903, 0.4994258
        %v905 = vmul.f32 %v885, %v904
        %v906 = vadd.f32 %v905, 1.0
        %v907 = vrcp.pop %v906
        %v908 = vmul.f32 %v906, %v907
        %v909 = vsub.f32 1.0, %v908
        %v910 = vmul.f32 %v907, %v909
        %v911 = vadd.f32 %v907, %v910
        %vm912 = vweird.f32 %v906
        %vm913 = vweird.f32 %v907
        %vm914 = vmor %vm912, %vm913
        %v915 = vsel %vm914, %v907, %v911
        %v916 = vand.u32 2147483647, %v906
        %vm917 = vcmp.eq.f32.partialorder %v916, 8.507059e+37
        %v918 = vand.u32 %v906, 2147483648
        %v919 = vor.u32 1.1754944e-38, %v918
        %v920 = vsel %vm917, %v919, %v915
        %v921 = vmul.f32 %v896, %v920
        %v922 = vmin.f32 %v921, 1.0
        %v923 = vmax.f32 %v922, -1.0
        %v924 = vmul.f32 %v791, %v791
        %v925 = vmin.f32 16.0, %v924
        %v926 = vmul.f32 %v925, 2.1237322e-06
        %v927 = vadd.f32 %v926, 0.00028619796
        %v928 = vmul.f32 %v925, %v927
        %v929 = vadd.f32 %v928, 0.0036580483
        %v930 = vmul.f32 %v925, %v929
        %v931 = vadd.f32 %v930, 0.05243302
        %v932 = vmul.f32 %v925, %v931
        %v933 = vadd.f32 %v932, 0.18741608
        %v934 = vmul.f32 %v925, %v933
        %v935 = vadd.f32 %v934, 1.1283791
        %v936 = vmul.f32 %v791, %v935
        %v937 = vmul.f32 %v925, 3.8918573e-05
        %v938 = vadd.f32 %v937, 0.001143296
        %v939 = vmul.f32 %v925, %v938
        %v940 = vadd.f32 %v939, 0.014752088
        %v941 = vmul.f32 %v925, %v940
        %v942 = vadd.f32 %v941, 0.112945676
        %v943 = vmul.f32 %v925, %v942
        %v944 = vadd.f32 %v943, 0.4994258
        %v945 = vmul.f32 %v925, %v944
        %v946 = vadd.f32 %v945, 1.0
        %v947 = vrcp.pop %v946
        %v948 = vmul.f32 %v946, %v947
        %v949 = vsub.f32 1.0, %v948
        %v950 = vmul.f32 %v947, %v949
        %v951 = vadd.f32 %v947, %v950
        %vm952 = vweird.f32 %v946
        %vm953 = vweird.f32 %v947
        %vm954 = vmor %vm952, %vm953
        %v955 = vsel %vm954, %v947, %v951
        %v956 = vand.u32 2147483647, %v946
        %vm957 = vcmp.eq.f32.partialorder %v956, 8.507059e+37
        %v958 = vand.u32 %v946, 2147483648
        %v959 = vor.u32 1.1754944e-38, %v958
        %v960 = vsel %vm957, %v959, %v955
        %v961 = vmul.f32 %v936, %v960
        %v962 = vmin.f32 %v961, 1.0
        %v963 = vmax.f32 %v962, -1.0
        %v964 = vmul.f32 %v792, %v792
        %v965 = vmin.f32 16.0, %v964
        %v966 = vmul.f32 %v965, 2.1237322e-06
        %v967 = vadd.f32 %v966, 0.00028619796
        %v968 = vmul.f32 %v965, %v967
        %v969 = vadd.f32 %v968, 0.0036580483
        %v970 = vmul.f32 %v965, %v969
        %v971 = vadd.f32 %v970, 0.05243302
        %v972 = vmul.f32 %v965, %v971
        %v973 = vadd.f32 %v972, 0.18741608
        %v974 = vmul.f32 %v965, %v973
        %v975 = vadd.f32 %v974, 1.1283791
        %v976 = vmul.f32 %v792, %v975
        %v977 = vmul.f32 %v965, 3.8918573e-05
        %v978 = vadd.f32 %v977, 0.001143296
        %v979 = vmul.f32 %v965, %v978
        %v980 = vadd.f32 %v979, 0.014752088
        %v981 = vmul.f32 %v965, %v980
        %v982 = vadd.f32 %v981, 0.112945676
        %v983 = vmul.f32 %v965, %v982
        %v984 = vadd.f32 %v983, 0.4994258
        %v985 = vmul.f32 %v965, %v984
        %v986 = vadd.f32 %v985, 1.0
        %v987 = vrcp.pop %v986
        %v988 = vmul.f32 %v986, %v987
        %v989 = vsub.f32 1.0, %v988
        %v990 = vmul.f32 %v987, %v989
        %v991 = vadd.f32 %v987, %v990
        %vm992 = vweird.f32 %v986
        %vm993 = vweird.f32 %v987
        %vm994 = vmor %vm992, %vm993
        %v995 = vsel %vm994, %v987, %v991
        %v996 = vand.u32 2147483647, %v986
        %vm997 = vcmp.eq.f32.partialorder %v996, 8.507059e+37
        %v998 = vand.u32 %v986, 2147483648
        %v999 = vor.u32 1.1754944e-38, %v998
        %v1000 = vsel %vm997, %v999, %v995
        %v1001 = vmul.f32 %v976, %v1000
        %v1002 = vmin.f32 %v1001, 1.0
        %v1003 = vmax.f32 %v1002, -1.0
        %v1004 = vmul.f32 %v793, %v793
        %v1005 = vmin.f32 16.0, %v1004
        %v1006 = vmul.f32 %v1005, 2.1237322e-06
        %v1007 = vadd.f32 %v1006, 0.00028619796
        %v1008 = vmul.f32 %v1005, %v1007
        %v1009 = vadd.f32 %v1008, 0.0036580483
        %v1010 = vmul.f32 %v1005, %v1009
        %v1011 = vadd.f32 %v1010, 0.05243302
        %v1012 = vmul.f32 %v1005, %v1011
        %v1013 = vadd.f32 %v1012, 0.18741608
        %v1014 = vmul.f32 %v1005, %v1013
        %v1015 = vadd.f32 %v1014, 1.1283791
        %v1016 = vmul.f32 %v793, %v1015
        %v1017 = vmul.f32 %v1005, 3.8918573e-05
        %v1018 = vadd.f32 %v1017, 0.001143296
        %v1019 = vmul.f32 %v1005, %v1018
        %v1020 = vadd.f32 %v1019, 0.014752088
        %v1021 = vmul.f32 %v1005, %v1020
        %v1022 = vadd.f32 %v1021, 0.112945676
        %v1023 = vmul.f32 %v1005, %v1022
        %v1024 = vadd.f32 %v1023, 0.4994258
        %v1025 = vmul.f32 %v1005, %v1024
        %v1026 = vadd.f32 %v1025, 1.0
        %v1027 = vrcp.pop %v1026
        %v1028 = vmul.f32 %v1026, %v1027
        %v1029 = vsub.f32 1.0, %v1028
        %v1030 = vmul.f32 %v1027, %v1029
        %v1031 = vadd.f32 %v1027, %v1030
        %vm1032 = vweird.f32 %v1026
        %vm1033 = vweird.f32 %v1027
        %vm1034 = vmor %vm1032, %vm1033
        %v1035 = vsel %vm1034, %v1027, %v1031
        %v1036 = vand.u32 2147483647, %v1026
        %vm1037 = vcmp.eq.f32.partialorder %v1036, 8.507059e+37
        %v1038 = vand.u32 %v1026, 2147483648
        %v1039 = vor.u32 1.1754944e-38, %v1038
        %v1040 = vsel %vm1037, %v1039, %v1035
        %v1041 = vmul.f32 %v1016, %v1040
        %v1042 = vmin.f32 %v1041, 1.0
        %v1043 = vmax.f32 %v1042, -1.0
        %v1044 = vmul.f32 %v794, %v794
        %v1045 = vmin.f32 16.0, %v1044
        %v1046 = vmul.f32 %v1045, 2.1237322e-06
        %v1047 = vadd.f32 %v1046, 0.00028619796
        %v1048 = vmul.f32 %v1045, %v1047
        %v1049 = vadd.f32 %v1048, 0.0036580483
        %v1050 = vmul.f32 %v1045, %v1049
        %v1051 = vadd.f32 %v1050, 0.05243302
        %v1052 = vmul.f32 %v1045, %v1051
        %v1053 = vadd.f32 %v1052, 0.18741608
        %v1054 = vmul.f32 %v1045, %v1053
        %v1055 = vadd.f32 %v1054, 1.1283791
        %v1056 = vmul.f32 %v794, %v1055
        %v1057 = vmul.f32 %v1045, 3.8918573e-05
        %v1058 = vadd.f32 %v1057, 0.001143296
        %v1059 = vmul.f32 %v1045, %v1058
        %v1060 = vadd.f32 %v1059, 0.014752088
        %v1061 = vmul.f32 %v1045, %v1060
        %v1062 = vadd.f32 %v1061, 0.112945676
        %v1063 = vmul.f32 %v1045, %v1062
        %v1064 = vadd.f32 %v1063, 0.4994258
        %v1065 = vmul.f32 %v1045, %v1064
        %v1066 = vadd.f32 %v1065, 1.0
        %v1067 = vrcp.pop %v1066
        %v1068 = vmul.f32 %v1066, %v1067
        %v1069 = vsub.f32 1.0, %v1068
        %v1070 = vmul.f32 %v1067, %v1069
        %v1071 = vadd.f32 %v1067, %v1070
        %vm1072 = vweird.f32 %v1066
        %vm1073 = vweird.f32 %v1067
        %vm1074 = vmor %vm1072, %vm1073
        %v1075 = vsel %vm1074, %v1067, %v1071
        %v1076 = vand.u32 2147483647, %v1066
        %vm1077 = vcmp.eq.f32.partialorder %v1076, 8.507059e+37
        %v1078 = vand.u32 %v1066, 2147483648
        %v1079 = vor.u32 1.1754944e-38, %v1078
        %v1080 = vsel %vm1077, %v1079, %v1075
        %v1081 = vmul.f32 %v1056, %v1080
        %v1082 = vmin.f32 %v1081, 1.0
        %v1083 = vmax.f32 %v1082, -1.0
        %v1084 = vmul.f32 %v795, %v795
        %v1085 = vmin.f32 16.0, %v1084
        %v1086 = vmul.f32 %v1085, 2.1237322e-06
        %v1087 = vadd.f32 %v1086, 0.00028619796
        %v1088 = vmul.f32 %v1085, %v1087
        %v1089 = vadd.f32 %v1088, 0.0036580483
        %v1090 = vmul.f32 %v1085, %v1089
        %v1091 = vadd.f32 %v1090, 0.05243302
        %v1092 = vmul.f32 %v1085, %v1091
        %v1093 = vadd.f32 %v1092, 0.18741608
        %v1094 = vmul.f32 %v1085, %v1093
        %v1095 = vadd.f32 %v1094, 1.1283791
        %v1096 = vmul.f32 %v795, %v1095
        %v1097 = vmul.f32 %v1085, 3.8918573e-05
        %v1098 = vadd.f32 %v1097, 0.001143296
        %v1099 = vmul.f32 %v1085, %v1098
        %v1100 = vadd.f32 %v1099, 0.014752088
        %v1101 = vmul.f32 %v1085, %v1100
        %v1102 = vadd.f32 %v1101, 0.112945676
        %v1103 = vmul.f32 %v1085, %v1102
        %v1104 = vadd.f32 %v1103, 0.4994258
        %v1105 = vmul.f32 %v1085, %v1104
        %v1106 = vadd.f32 %v1105, 1.0
        %v1107 = vrcp.pop %v1106
        %v1108 = vmul.f32 %v1106, %v1107
        %v1109 = vsub.f32 1.0, %v1108
        %v1110 = vmul.f32 %v1107, %v1109
        %v1111 = vadd.f32 %v1107, %v1110
        %vm1112 = vweird.f32 %v1106
        %vm1113 = vweird.f32 %v1107
        %vm1114 = vmor %vm1112, %vm1113
        %v1115 = vsel %vm1114, %v1107, %v1111
        %v1116 = vand.u32 2147483647, %v1106
        %vm1117 = vcmp.eq.f32.partialorder %v1116, 8.507059e+37
        %v1118 = vand.u32 %v1106, 2147483648
        %v1119 = vor.u32 1.1754944e-38, %v1118
        %v1120 = vsel %vm1117, %v1119, %v1115
        %v1121 = vmul.f32 %v1096, %v1120
        %v1122 = vmin.f32 %v1121, 1.0
        %v1123 = vmax.f32 %v1122, -1.0
        %v1124 = vmul.f32 %v796, %v796
        %v1125 = vmin.f32 16.0, %v1124
        %v1126 = vmul.f32 %v1125, 2.1237322e-06
        %v1127 = vadd.f32 %v1126, 0.00028619796
        %v1128 = vmul.f32 %v1125, %v1127
        %v1129 = vadd.f32 %v1128, 0.0036580483
        %v1130 = vmul.f32 %v1125, %v1129
        %v1131 = vadd.f32 %v1130, 0.05243302
        %v1132 = vmul.f32 %v1125, %v1131
        %v1133 = vadd.f32 %v1132, 0.18741608
        %v1134 = vmul.f32 %v1125, %v1133
        %v1135 = vadd.f32 %v1134, 1.1283791
        %v1136 = vmul.f32 %v796, %v1135
        %v1137 = vmul.f32 %v1125, 3.8918573e-05
        %v1138 = vadd.f32 %v1137, 0.001143296
        %v1139 = vmul.f32 %v1125, %v1138
        %v1140 = vadd.f32 %v1139, 0.014752088
        %v1141 = vmul.f32 %v1125, %v1140
        %v1142 = vadd.f32 %v1141, 0.112945676
        %v1143 = vmul.f32 %v1125, %v1142
        %v1144 = vadd.f32 %v1143, 0.4994258
        %v1145 = vmul.f32 %v1125, %v1144
        %v1146 = vadd.f32 %v1145, 1.0
        %v1147 = vrcp.pop %v1146
        %v1148 = vmul.f32 %v1146, %v1147
        %v1149 = vsub.f32 1.0, %v1148
        %v1150 = vmul.f32 %v1147, %v1149
        %v1151 = vadd.f32 %v1147, %v1150
        %vm1152 = vweird.f32 %v1146
        %vm1153 = vweird.f32 %v1147
        %vm1154 = vmor %vm1152, %vm1153
        %v1155 = vsel %vm1154, %v1147, %v1151
        %v1156 = vand.u32 2147483647, %v1146
        %vm1157 = vcmp.eq.f32.partialorder %v1156, 8.507059e+37
        %v1158 = vand.u32 %v1146, 2147483648
        %v1159 = vor.u32 1.1754944e-38, %v1158
        %v1160 = vsel %vm1157, %v1159, %v1155
        %v1161 = vmul.f32 %v1136, %v1160
        %v1162 = vmin.f32 %v1161, 1.0
        %v1163 = vmax.f32 %v1162, -1.0
        %v1164 = vmul.f32 %v797, %v797
        %v1165 = vmin.f32 16.0, %v1164
        %v1166 = vmul.f32 %v1165, 2.1237322e-06
        %v1167 = vadd.f32 %v1166, 0.00028619796
        %v1168 = vmul.f32 %v1165, %v1167
        %v1169 = vadd.f32 %v1168, 0.0036580483
        %v1170 = vmul.f32 %v1165, %v1169
        %v1171 = vadd.f32 %v1170, 0.05243302
        %v1172 = vmul.f32 %v1165, %v1171
        %v1173 = vadd.f32 %v1172, 0.18741608
        %v1174 = vmul.f32 %v1165, %v1173
        %v1175 = vadd.f32 %v1174, 1.1283791
        %v1176 = vmul.f32 %v797, %v1175
        %v1177 = vmul.f32 %v1165, 3.8918573e-05
        %v1178 = vadd.f32 %v1177, 0.001143296
        %v1179 = vmul.f32 %v1165, %v1178
        %v1180 = vadd.f32 %v1179, 0.014752088
        %v1181 = vmul.f32 %v1165, %v1180
        %v1182 = vadd.f32 %v1181, 0.112945676
        %v1183 = vmul.f32 %v1165, %v1182
        %v1184 = vadd.f32 %v1183, 0.4994258
        %v1185 = vmul.f32 %v1165, %v1184
        %v1186 = vadd.f32 %v1185, 1.0
        %v1187 = vrcp.pop %v1186
        %v1188 = vmul.f32 %v1186, %v1187
        %v1189 = vsub.f32 1.0, %v1188
        %v1190 = vmul.f32 %v1187, %v1189
        %v1191 = vadd.f32 %v1187, %v1190
        %vm1192 = vweird.f32 %v1186
        %vm1193 = vweird.f32 %v1187
        %vm1194 = vmor %vm1192, %vm1193
        %v1195 = vsel %vm1194, %v1187, %v1191
        %v1196 = vand.u32 2147483647, %v1186
        %vm1197 = vcmp.eq.f32.partialorder %v1196, 8.507059e+37
        %v1198 = vand.u32 %v1186, 2147483648
        %v1199 = vor.u32 1.1754944e-38, %v1198
        %v1200 = vsel %vm1197, %v1199, %v1195
        %v1201 = vmul.f32 %v1176, %v1200
        %v1202 = vmin.f32 %v1201, 1.0
        %v1203 = vmax.f32 %v1202, -1.0
        %v1204 = vmul.f32 %v798, %v798
        %v1205 = vmin.f32 16.0, %v1204
        %v1206 = vmul.f32 %v1205, 2.1237322e-06
        %v1207 = vadd.f32 %v1206, 0.00028619796
        %v1208 = vmul.f32 %v1205, %v1207
        %v1209 = vadd.f32 %v1208, 0.0036580483
        %v1210 = vmul.f32 %v1205, %v1209
        %v1211 = vadd.f32 %v1210, 0.05243302
        %v1212 = vmul.f32 %v1205, %v1211
        %v1213 = vadd.f32 %v1212, 0.18741608
        %v1214 = vmul.f32 %v1205, %v1213
        %v1215 = vadd.f32 %v1214, 1.1283791
        %v1216 = vmul.f32 %v798, %v1215
        %v1217 = vmul.f32 %v1205, 3.8918573e-05
        %v1218 = vadd.f32 %v1217, 0.001143296
        %v1219 = vmul.f32 %v1205, %v1218
        %v1220 = vadd.f32 %v1219, 0.014752088
        %v1221 = vmul.f32 %v1205, %v1220
        %v1222 = vadd.f32 %v1221, 0.112945676
        %v1223 = vmul.f32 %v1205, %v1222
        %v1224 = vadd.f32 %v1223, 0.4994258
        %v1225 = vmul.f32 %v1205, %v1224
        %v1226 = vadd.f32 %v1225, 1.0
        %v1227 = vrcp.pop %v1226
        %v1228 = vmul.f32 %v1226, %v1227
        %v1229 = vsub.f32 1.0, %v1228
        %v1230 = vmul.f32 %v1227, %v1229
        %v1231 = vadd.f32 %v1227, %v1230
        %vm1232 = vweird.f32 %v1226
        %vm1233 = vweird.f32 %v1227
        %vm1234 = vmor %vm1232, %vm1233
        %v1235 = vsel %vm1234, %v1227, %v1231
        %v1236 = vand.u32 2147483647, %v1226
        %vm1237 = vcmp.eq.f32.partialorder %v1236, 8.507059e+37
        %v1238 = vand.u32 %v1226, 2147483648
        %v1239 = vor.u32 1.1754944e-38, %v1238
        %v1240 = vsel %vm1237, %v1239, %v1235
        %v1241 = vmul.f32 %v1216, %v1240
        %v1242 = vmin.f32 %v1241, 1.0
        %v1243 = vmax.f32 %v1242, -1.0
        %v1244 = vmul.f32 %v799, %v799
        %v1245 = vmin.f32 16.0, %v1244
        %v1246 = vmul.f32 %v1245, 2.1237322e-06
        %v1247 = vadd.f32 %v1246, 0.00028619796
        %v1248 = vmul.f32 %v1245, %v1247
        %v1249 = vadd.f32 %v1248, 0.0036580483
        %v1250 = vmul.f32 %v1245, %v1249
        %v1251 = vadd.f32 %v1250, 0.05243302
        %v1252 = vmul.f32 %v1245, %v1251
        %v1253 = vadd.f32 %v1252, 0.18741608
        %v1254 = vmul.f32 %v1245, %v1253
        %v1255 = vadd.f32 %v1254, 1.1283791
        %v1256 = vmul.f32 %v799, %v1255
        %v1257 = vmul.f32 %v1245, 3.8918573e-05
        %v1258 = vadd.f32 %v1257, 0.001143296
        %v1259 = vmul.f32 %v1245, %v1258
        %v1260 = vadd.f32 %v1259, 0.014752088
        %v1261 = vmul.f32 %v1245, %v1260
        %v1262 = vadd.f32 %v1261, 0.112945676
        %v1263 = vmul.f32 %v1245, %v1262
        %v1264 = vadd.f32 %v1263, 0.4994258
        %v1265 = vmul.f32 %v1245, %v1264
        %v1266 = vadd.f32 %v1265, 1.0
        %v1267 = vrcp.pop %v1266
        %v1268 = vmul.f32 %v1266, %v1267
        %v1269 = vsub.f32 1.0, %v1268
        %v1270 = vmul.f32 %v1267, %v1269
        %v1271 = vadd.f32 %v1267, %v1270
        %vm1272 = vweird.f32 %v1266
        %vm1273 = vweird.f32 %v1267
        %vm1274 = vmor %vm1272, %vm1273
        %v1275 = vsel %vm1274, %v1267, %v1271
        %v1276 = vand.u32 2147483647, %v1266
        %vm1277 = vcmp.eq.f32.partialorder %v1276, 8.507059e+37
        %v1278 = vand.u32 %v1266, 2147483648
        %v1279 = vor.u32 1.1754944e-38, %v1278
        %v1280 = vsel %vm1277, %v1279, %v1275
        %v1281 = vmul.f32 %v1256, %v1280
        %v1282 = vmin.f32 %v1281, 1.0
        %v1283 = vmax.f32 %v1282, -1.0
        %v1284 = vmul.f32 %v800, %v800
        %v1285 = vmin.f32 16.0, %v1284
        %v1286 = vmul.f32 %v1285, 2.1237322e-06
        %v1287 = vadd.f32 %v1286, 0.00028619796
        %v1288 = vmul.f32 %v1285, %v1287
        %v1289 = vadd.f32 %v1288, 0.0036580483
        %v1290 = vmul.f32 %v1285, %v1289
        %v1291 = vadd.f32 %v1290, 0.05243302
        %v1292 = vmul.f32 %v1285, %v1291
        %v1293 = vadd.f32 %v1292, 0.18741608
        %v1294 = vmul.f32 %v1285, %v1293
        %v1295 = vadd.f32 %v1294, 1.1283791
        %v1296 = vmul.f32 %v800, %v1295
        %v1297 = vmul.f32 %v1285, 3.8918573e-05
        %v1298 = vadd.f32 %v1297, 0.001143296
        %v1299 = vmul.f32 %v1285, %v1298
        %v1300 = vadd.f32 %v1299, 0.014752088
        %v1301 = vmul.f32 %v1285, %v1300
        %v1302 = vadd.f32 %v1301, 0.112945676
        %v1303 = vmul.f32 %v1285, %v1302
        %v1304 = vadd.f32 %v1303, 0.4994258
        %v1305 = vmul.f32 %v1285, %v1304
        %v1306 = vadd.f32 %v1305, 1.0
        %v1307 = vrcp.pop %v1306
        %v1308 = vmul.f32 %v1306, %v1307
        %v1309 = vsub.f32 1.0, %v1308
        %v1310 = vmul.f32 %v1307, %v1309
        %v1311 = vadd.f32 %v1307, %v1310
        %vm1312 = vweird.f32 %v1306
        %vm1313 = vweird.f32 %v1307
        %vm1314 = vmor %vm1312, %vm1313
        %v1315 = vsel %vm1314, %v1307, %v1311
        %v1316 = vand.u32 2147483647, %v1306
        %vm1317 = vcmp.eq.f32.partialorder %v1316, 8.507059e+37
        %v1318 = vand.u32 %v1306, 2147483648
        %v1319 = vor.u32 1.1754944e-38, %v1318
        %v1320 = vsel %vm1317, %v1319, %v1315
        %v1321 = vmul.f32 %v1296, %v1320
        %v1322 = vmin.f32 %v1321, 1.0
        %v1323 = vmax.f32 %v1322, -1.0
        %v1324 = vmul.f32 %v801, %v801
        %v1325 = vmin.f32 16.0, %v1324
        %v1326 = vmul.f32 %v1325, 2.1237322e-06
        %v1327 = vadd.f32 %v1326, 0.00028619796
        %v1328 = vmul.f32 %v1325, %v1327
        %v1329 = vadd.f32 %v1328, 0.0036580483
        %v1330 = vmul.f32 %v1325, %v1329
        %v1331 = vadd.f32 %v1330, 0.05243302
        %v1332 = vmul.f32 %v1325, %v1331
        %v1333 = vadd.f32 %v1332, 0.18741608
        %v1334 = vmul.f32 %v1325, %v1333
        %v1335 = vadd.f32 %v1334, 1.1283791
        %v1336 = vmul.f32 %v801, %v1335
        %v1337 = vmul.f32 %v1325, 3.8918573e-05
        %v1338 = vadd.f32 %v1337, 0.001143296
        %v1339 = vmul.f32 %v1325, %v1338
        %v1340 = vadd.f32 %v1339, 0.014752088
        %v1341 = vmul.f32 %v1325, %v1340
        %v1342 = vadd.f32 %v1341, 0.112945676
        %v1343 = vmul.f32 %v1325, %v1342
        %v1344 = vadd.f32 %v1343, 0.4994258
        %v1345 = vmul.f32 %v1325, %v1344
        %v1346 = vadd.f32 %v1345, 1.0
        %v1347 = vrcp.pop %v1346
        %v1348 = vmul.f32 %v1346, %v1347
        %v1349 = vsub.f32 1.0, %v1348
        %v1350 = vmul.f32 %v1347, %v1349
        %v1351 = vadd.f32 %v1347, %v1350
        %vm1352 = vweird.f32 %v1346
        %vm1353 = vweird.f32 %v1347
        %vm1354 = vmor %vm1352, %vm1353
        %v1355 = vsel %vm1354, %v1347, %v1351
        %v1356 = vand.u32 2147483647, %v1346
        %vm1357 = vcmp.eq.f32.partialorder %v1356, 8.507059e+37
        %v1358 = vand.u32 %v1346, 2147483648
        %v1359 = vor.u32 1.1754944e-38, %v1358
        %v1360 = vsel %vm1357, %v1359, %v1355
        %v1361 = vmul.f32 %v1336, %v1360
        %v1362 = vmin.f32 %v1361, 1.0
        %v1363 = vmax.f32 %v1362, -1.0
        %v1364 = vmul.f32 %v802, %v802
        %v1365 = vmin.f32 16.0, %v1364
        %v1366 = vmul.f32 %v1365, 2.1237322e-06
        %v1367 = vadd.f32 %v1366, 0.00028619796
        %v1368 = vmul.f32 %v1365, %v1367
        %v1369 = vadd.f32 %v1368, 0.0036580483
        %v1370 = vmul.f32 %v1365, %v1369
        %v1371 = vadd.f32 %v1370, 0.05243302
        %v1372 = vmul.f32 %v1365, %v1371
        %v1373 = vadd.f32 %v1372, 0.18741608
        %v1374 = vmul.f32 %v1365, %v1373
        %v1375 = vadd.f32 %v1374, 1.1283791
        %v1376 = vmul.f32 %v802, %v1375
        %v1377 = vmul.f32 %v1365, 3.8918573e-05
        %v1378 = vadd.f32 %v1377, 0.001143296
        %v1379 = vmul.f32 %v1365, %v1378
        %v1380 = vadd.f32 %v1379, 0.014752088
        %v1381 = vmul.f32 %v1365, %v1380
        %v1382 = vadd.f32 %v1381, 0.112945676
        %v1383 = vmul.f32 %v1365, %v1382
        %v1384 = vadd.f32 %v1383, 0.4994258
        %v1385 = vmul.f32 %v1365, %v1384
        %v1386 = vadd.f32 %v1385, 1.0
        %v1387 = vrcp.pop %v1386
        %v1388 = vmul.f32 %v1386, %v1387
        %v1389 = vsub.f32 1.0, %v1388
        %v1390 = vmul.f32 %v1387, %v1389
        %v1391 = vadd.f32 %v1387, %v1390
        %vm1392 = vweird.f32 %v1386
        %vm1393 = vweird.f32 %v1387
        %vm1394 = vmor %vm1392, %vm1393
        %v1395 = vsel %vm1394, %v1387, %v1391
        %v1396 = vand.u32 2147483647, %v1386
        %vm1397 = vcmp.eq.f32.partialorder %v1396, 8.507059e+37
        %v1398 = vand.u32 %v1386, 2147483648
        %v1399 = vor.u32 1.1754944e-38, %v1398
        %v1400 = vsel %vm1397, %v1399, %v1395
        %v1401 = vmul.f32 %v1376, %v1400
        %v1402 = vmin.f32 %v1401, 1.0
        %v1403 = vmax.f32 %v1402, -1.0
        %v1404 = vmul.f32 %v803, %v803
        %v1405 = vmin.f32 16.0, %v1404
        %v1406 = vmul.f32 %v1405, 2.1237322e-06
        %v1407 = vadd.f32 %v1406, 0.00028619796
        %v1408 = vmul.f32 %v1405, %v1407
        %v1409 = vadd.f32 %v1408, 0.0036580483
        %v1410 = vmul.f32 %v1405, %v1409
        %v1411 = vadd.f32 %v1410, 0.05243302
        %v1412 = vmul.f32 %v1405, %v1411
        %v1413 = vadd.f32 %v1412, 0.18741608
        %v1414 = vmul.f32 %v1405, %v1413
        %v1415 = vadd.f32 %v1414, 1.1283791
        %v1416 = vmul.f32 %v803, %v1415
        %v1417 = vmul.f32 %v1405, 3.8918573e-05
        %v1418 = vadd.f32 %v1417, 0.001143296
        %v1419 = vmul.f32 %v1405, %v1418
        %v1420 = vadd.f32 %v1419, 0.014752088
        %v1421 = vmul.f32 %v1405, %v1420
        %v1422 = vadd.f32 %v1421, 0.112945676
        %v1423 = vmul.f32 %v1405, %v1422
        %v1424 = vadd.f32 %v1423, 0.4994258
        %v1425 = vmul.f32 %v1405, %v1424
        %v1426 = vadd.f32 %v1425, 1.0
        %v1427 = vrcp.pop %v1426
        %v1428 = vmul.f32 %v1426, %v1427
        %v1429 = vsub.f32 1.0, %v1428
        %v1430 = vmul.f32 %v1427, %v1429
        %v1431 = vadd.f32 %v1427, %v1430
        %vm1432 = vweird.f32 %v1426
        %vm1433 = vweird.f32 %v1427
        %vm1434 = vmor %vm1432, %vm1433
        %v1435 = vsel %vm1434, %v1427, %v1431
        %v1436 = vand.u32 2147483647, %v1426
        %vm1437 = vcmp.eq.f32.partialorder %v1436, 8.507059e+37
        %v1438 = vand.u32 %v1426, 2147483648
        %v1439 = vor.u32 1.1754944e-38, %v1438
        %v1440 = vsel %vm1437, %v1439, %v1435
        %v1441 = vmul.f32 %v1416, %v1440
        %v1442 = vmin.f32 %v1441, 1.0
        %v1443 = vmax.f32 %v1442, -1.0
        %v1444 = vadd.f32 %v843, 1.0
        %v1445 = vadd.f32 %v883, 1.0
        %v1446 = vadd.f32 %v923, 1.0
        %v1447 = vadd.f32 %v963, 1.0
        %v1448 = vadd.f32 %v1003, 1.0
        %v1449 = vadd.f32 %v1043, 1.0
        %v1450 = vadd.f32 %v1083, 1.0
        %v1451 = vadd.f32 %v1123, 1.0
        %v1452 = vadd.f32 %v1163, 1.0
        %v1453 = vadd.f32 %v1203, 1.0
        %v1454 = vadd.f32 %v1243, 1.0
        %v1455 = vadd.f32 %v1283, 1.0
        %v1456 = vadd.f32 %v1323, 1.0
        %v1457 = vadd.f32 %v1363, 1.0
        %v1458 = vadd.f32 %v1403, 1.0
        %v1459 = vadd.f32 %v1443, 1.0
        %v1460 = vmul.f32 %v772, %v1444
        %v1461 = vmul.f32 %v773, %v1445
        %v1462 = vmul.f32 %v774, %v1446
        %v1463 = vmul.f32 %v775, %v1447
        %v1464 = vmul.f32 %v776, %v1448
        %v1465 = vmul.f32 %v777, %v1449
        %v1466 = vmul.f32 %v778, %v1450
        %v1467 = vmul.f32 %v779, %v1451
        %v1468 = vmul.f32 %v780, %v1452
        %v1469 = vmul.f32 %v781, %v1453
        %v1470 = vmul.f32 %v782, %v1454
        %v1471 = vmul.f32 %v783, %v1455
        %v1472 = vmul.f32 %v784, %v1456
        %v1473 = vmul.f32 %v785, %v1457
        %v1474 = vmul.f32 %v786, %v1458
        %v1475 = vmul.f32 %v787, %v1459
        %v1476 = vpack.c.bf16 %v1461, %v1460
        %v1477 = vpack.c.bf16 %v1463, %v1462
        %v1478 = vpack.c.bf16 %v1465, %v1464
        %v1479 = vpack.c.bf16 %v1467, %v1466
        %v1480 = vpack.c.bf16 %v1469, %v1468
        %v1481 = vpack.c.bf16 %v1471, %v1470
        %v1482 = vpack.c.bf16 %v1473, %v1472
        %v1483 = vpack.c.bf16 %v1475, %v1474
        %v1484 = vld [vmem:[#allocation7] sm:$0xf]
        %v1485 = vld [vmem:[#allocation7 + $0x4] sm:$0xf]
        %v1486 = vld [vmem:[#allocation7 + $0x8] sm:$0xf]
        %v1487 = vld [vmem:[#allocation7 + $0xc] sm:$0xf]
        %v1488 = vld [vmem:[#allocation7 + $0x10] sm:$0xf]
        %v1489 = vld [vmem:[#allocation7 + $0x14] sm:$0xf]
        %v1490 = vld [vmem:[#allocation7 + $0x18] sm:$0xf]
        %v1491 = vld [vmem:[#allocation7 + $0x1c] sm:$0xf]
        %v1492 = vld [vmem:[#allocation7 + $0x20] sm:$0xf]
        %v1493 = vld [vmem:[#allocation7 + $0x24] sm:$0xf]
        %v1494 = vld [vmem:[#allocation7 + $0x28] sm:$0xf]
        %v1495 = vld [vmem:[#allocation7 + $0x2c] sm:$0xf]
        %v1496 = vld [vmem:[#allocation7 + $0x30] sm:$0xf]
        %v1497 = vld [vmem:[#allocation7 + $0x34] sm:$0xf]
        %v1498 = vld [vmem:[#allocation7 + $0x38] sm:$0xf]
        %v1499 = vld [vmem:[#allocation7 + $0x3c] sm:$0xf]
        %v1500 = vld [vmem:[%s6] sm:$0x1]
        %v1502 = vperm.slane %v1500, 0
        %v1520 = vunpack.c.l.b16 %v1484
        %v1521 = vunpack.c.l.b16 %v1485
        %v1522 = vunpack.c.l.b16 %v1486
        %v1523 = vunpack.c.l.b16 %v1487
        %v1524 = vunpack.c.l.b16 %v1488
        %v1525 = vunpack.c.l.b16 %v1489
        %v1526 = vunpack.c.l.b16 %v1490
        %v1527 = vunpack.c.l.b16 %v1491
        %v1528 = vunpack.c.l.b16 %v1492
        %v1529 = vunpack.c.l.b16 %v1493
        %v1530 = vunpack.c.l.b16 %v1494
        %v1531 = vunpack.c.l.b16 %v1495
        %v1532 = vunpack.c.l.b16 %v1496
        %v1533 = vunpack.c.l.b16 %v1497
        %v1534 = vunpack.c.l.b16 %v1498
        %v1535 = vunpack.c.l.b16 %v1499
        %v1536 = vpack.c.b16 %v1521, %v1520
        %v1537 = vpack.c.b16 %v1523, %v1522
        %v1538 = vpack.c.b16 %v1525, %v1524
        %v1539 = vpack.c.b16 %v1527, %v1526
        %v1540 = vpack.c.b16 %v1529, %v1528
        %v1541 = vpack.c.b16 %v1531, %v1530
        %v1542 = vpack.c.b16 %v1533, %v1532
        %v1543 = vpack.c.b16 %v1535, %v1534
        %1552 = vmatpush.bf16.msra.mxu0 %v1543
        %1553 = vmatpush.bf16.msra.mxu0 %v1542
        %1554 = vmatpush.bf16.msra.mxu0 %v1541
        %1555 = vmatpush.bf16.msra.mxu0 %v1540
        %1556 = vmatpush.bf16.msra.mxu0 %v1539
        %1557 = vmatpush.bf16.msra.mxu0 %v1538
        %1558 = vmatpush.bf16.msra.mxu0 %v1537
        %1559 = vmatpush.bf16.msra.mxu0 %v1536
        %1560 = vmatmul.bf16.gmra.mxu0 %v1476
        %v1561 = vpop.f32.mrf.mxu0
        %v1562 = vadd.f32 %v1502, %v1561
        %v1563 = vpop.f32.mrf.mxu0
        %v1564 = vadd.f32 %v1502, %v1563
        %1565 = vmatmul.bf16.gmra.mxu0 %v1477
        %v1566 = vpop.f32.mrf.mxu0
        %v1567 = vadd.f32 %v1502, %v1566
        %v1568 = vpop.f32.mrf.mxu0
        %v1569 = vadd.f32 %v1502, %v1568
        %1570 = vmatmul.bf16.gmra.mxu0 %v1478
        %v1571 = vpop.f32.mrf.mxu0
        %v1572 = vadd.f32 %v1502, %v1571
        %v1573 = vpop.f32.mrf.mxu0
        %v1574 = vadd.f32 %v1502, %v1573
        %1575 = vmatmul.bf16.gmra.mxu0 %v1479
        %v1576 = vpop.f32.mrf.mxu0
        %v1577 = vadd.f32 %v1502, %v1576
        %v1578 = vpop.f32.mrf.mxu0
        %v1579 = vadd.f32 %v1502, %v1578
        %1580 = vmatmul.bf16.gmra.mxu0 %v1480
        %v1581 = vpop.f32.mrf.mxu0
        %v1582 = vadd.f32 %v1502, %v1581
        %v1583 = vpop.f32.mrf.mxu0
        %v1584 = vadd.f32 %v1502, %v1583
        %1585 = vmatmul.bf16.gmra.mxu0 %v1481
        %v1586 = vpop.f32.mrf.mxu0
        %v1587 = vadd.f32 %v1502, %v1586
        %v1588 = vpop.f32.mrf.mxu0
        %v1589 = vadd.f32 %v1502, %v1588
        %1590 = vmatmul.bf16.gmra.mxu0 %v1482
        %v1591 = vpop.f32.mrf.mxu0
        %v1592 = vadd.f32 %v1502, %v1591
        %v1593 = vpop.f32.mrf.mxu0
        %v1594 = vadd.f32 %v1502, %v1593
        %1595 = vmatmul.bf16.gmra.mxu0 %v1483
        %v1596 = vpop.f32.mrf.mxu0
        %v1597 = vadd.f32 %v1502, %v1596
        %v1598 = vpop.f32.mrf.mxu0
        %v1599 = vadd.f32 %v1502, %v1598
        %1600 = vdwg.mxu0
        %v1601 = vadd.f32 %v1562, %v608
        %v1602 = vadd.f32 %v1564, %v610
        %v1603 = vadd.f32 %v1567, %v613
        %v1604 = vadd.f32 %v1569, %v615
        %v1605 = vadd.f32 %v1572, %v618
        %v1606 = vadd.f32 %v1574, %v620
        %v1607 = vadd.f32 %v1577, %v623
        %v1608 = vadd.f32 %v1579, %v625
        %v1609 = vadd.f32 %v1582, %v628
        %v1610 = vadd.f32 %v1584, %v630
        %v1611 = vadd.f32 %v1587, %v633
        %v1612 = vadd.f32 %v1589, %v635
        %v1613 = vadd.f32 %v1592, %v638
        %v1614 = vadd.f32 %v1594, %v640
        %v1615 = vadd.f32 %v1597, %v643
        %v1616 = vadd.f32 %v1599, %v645
        %1617 = vadd.xlane.f32.xlu0 %v1601
        %v1618 = vpop.xlane.xlu0 %1617
        %1619 = vadd.xlane.f32.xlu0 %v1602
        %v1620 = vpop.xlane.xlu0 %1619
        %1621 = vadd.xlane.f32.xlu0 %v1603
        %v1622 = vpop.xlane.xlu0 %1621
        %1623 = vadd.xlane.f32.xlu0 %v1604
        %v1624 = vpop.xlane.xlu0 %1623
        %1625 = vadd.xlane.f32.xlu0 %v1605
        %v1626 = vpop.xlane.xlu0 %1625
        %1627 = vadd.xlane.f32.xlu0 %v1606
        %v1628 = vpop.xlane.xlu0 %1627
        %1629 = vadd.xlane.f32.xlu0 %v1607
        %v1630 = vpop.xlane.xlu0 %1629
        %1631 = vadd.xlane.f32.xlu0 %v1608
        %v1632 = vpop.xlane.xlu0 %1631
        %1633 = vadd.xlane.f32.xlu0 %v1609
        %v1634 = vpop.xlane.xlu0 %1633
        %1635 = vadd.xlane.f32.xlu0 %v1610
        %v1636 = vpop.xlane.xlu0 %1635
        %1637 = vadd.xlane.f32.xlu0 %v1611
        %v1638 = vpop.xlane.xlu0 %1637
        %1639 = vadd.xlane.f32.xlu0 %v1612
        %v1640 = vpop.xlane.xlu0 %1639
        %1641 = vadd.xlane.f32.xlu0 %v1613
        %v1642 = vpop.xlane.xlu0 %1641
        %1643 = vadd.xlane.f32.xlu0 %v1614
        %v1644 = vpop.xlane.xlu0 %1643
        %1645 = vadd.xlane.f32.xlu0 %v1615
        %v1646 = vpop.xlane.xlu0 %1645
        %1647 = vadd.xlane.f32.xlu0 %v1616
        %v1648 = vpop.xlane.xlu0 %1647
        %v1649 = vrcp.pop 128.0
        %v1650 = vmul.f32 128.0, %v1649
        %v1651 = vsub.f32 1.0, %v1650
        %v1652 = vmul.f32 %v1649, %v1651
        %v1653 = vadd.f32 %v1649, %v1652
        %vm1654 = vweird.f32 %v1649
        %v1655 = vsel %vm1654, %v1649, %v1653
        %v1656 = vmul.f32 %v1618, %v1655
        %v1657 = vmul.f32 %v1620, %v1655
        %v1658 = vmul.f32 %v1622, %v1655
        %v1659 = vmul.f32 %v1624, %v1655
        %v1660 = vmul.f32 %v1626, %v1655
        %v1661 = vmul.f32 %v1628, %v1655
        %v1662 = vmul.f32 %v1630, %v1655
        %v1663 = vmul.f32 %v1632, %v1655
        %v1664 = vmul.f32 %v1634, %v1655
        %v1665 = vmul.f32 %v1636, %v1655
        %v1666 = vmul.f32 %v1638, %v1655
        %v1667 = vmul.f32 %v1640, %v1655
        %v1668 = vmul.f32 %v1642, %v1655
        %v1669 = vmul.f32 %v1644, %v1655
        %v1670 = vmul.f32 %v1646, %v1655
        %v1671 = vmul.f32 %v1648, %v1655
        %v1672 = vsub.f32 %v1601, %v1656
        %v1673 = vsub.f32 %v1602, %v1657
        %v1674 = vsub.f32 %v1603, %v1658
        %v1675 = vsub.f32 %v1604, %v1659
        %v1676 = vsub.f32 %v1605, %v1660
        %v1677 = vsub.f32 %v1606, %v1661
        %v1678 = vsub.f32 %v1607, %v1662
        %v1679 = vsub.f32 %v1608, %v1663
        %v1680 = vsub.f32 %v1609, %v1664
        %v1681 = vsub.f32 %v1610, %v1665
        %v1682 = vsub.f32 %v1611, %v1666
        %v1683 = vsub.f32 %v1612, %v1667
        %v1684 = vsub.f32 %v1613, %v1668
        %v1685 = vsub.f32 %v1614, %v1669
        %v1686 = vsub.f32 %v1615, %v1670
        %v1687 = vsub.f32 %v1616, %v1671
        %v1688 = vmul.f32 %v1672, %v1672
        %v1689 = vmul.f32 %v1673, %v1673
        %v1690 = vmul.f32 %v1674, %v1674
        %v1691 = vmul.f32 %v1675, %v1675
        %v1692 = vmul.f32 %v1676, %v1676
        %v1693 = vmul.f32 %v1677, %v1677
        %v1694 = vmul.f32 %v1678, %v1678
        %v1695 = vmul.f32 %v1679, %v1679
        %v1696 = vmul.f32 %v1680, %v1680
        %v1697 = vmul.f32 %v1681, %v1681
        %v1698 = vmul.f32 %v1682, %v1682
        %v1699 = vmul.f32 %v1683, %v1683
        %v1700 = vmul.f32 %v1684, %v1684
        %v1701 = vmul.f32 %v1685, %v1685
        %v1702 = vmul.f32 %v1686, %v1686
        %v1703 = vmul.f32 %v1687, %v1687
        %1704 = vadd.xlane.f32.xlu0 %v1688
        %v1705 = vpop.xlane.xlu0 %1704
        %1706 = vadd.xlane.f32.xlu0 %v1689
        %v1707 = vpop.xlane.xlu0 %1706
        %1708 = vadd.xlane.f32.xlu0 %v1690
        %v1709 = vpop.xlane.xlu0 %1708
        %1710 = vadd.xlane.f32.xlu0 %v1691
        %v1711 = vpop.xlane.xlu0 %1710
        %1712 = vadd.xlane.f32.xlu0 %v1692
        %v1713 = vpop.xlane.xlu0 %1712
        %1714 = vadd.xlane.f32.xlu0 %v1693
        %v1715 = vpop.xlane.xlu0 %1714
        %1716 = vadd.xlane.f32.xlu0 %v1694
        %v1717 = vpop.xlane.xlu0 %1716
        %1718 = vadd.xlane.f32.xlu0 %v1695
        %v1719 = vpop.xlane.xlu0 %1718
        %1720 = vadd.xlane.f32.xlu0 %v1696
        %v1721 = vpop.xlane.xlu0 %1720
        %1722 = vadd.xlane.f32.xlu0 %v1697
        %v1723 = vpop.xlane.xlu0 %1722
        %1724 = vadd.xlane.f32.xlu0 %v1698
        %v1725 = vpop.xlane.xlu0 %1724
        %1726 = vadd.xlane.f32.xlu0 %v1699
        %v1727 = vpop.xlane.xlu0 %1726
        %1728 = vadd.xlane.f32.xlu0 %v1700
        %v1729 = vpop.xlane.xlu0 %1728
        %1730 = vadd.xlane.f32.xlu0 %v1701
        %v1731 = vpop.xlane.xlu0 %1730
        %1732 = vadd.xlane.f32.xlu0 %v1702
        %v1733 = vpop.xlane.xlu0 %1732
        %1734 = vadd.xlane.f32.xlu0 %v1703
        %v1735 = vpop.xlane.xlu0 %1734
        %v1736 = vmul.f32 %v1705, %v1655
        %v1737 = vmul.f32 %v1707, %v1655
        %v1738 = vmul.f32 %v1709, %v1655
        %v1739 = vmul.f32 %v1711, %v1655
        %v1740 = vmul.f32 %v1713, %v1655
        %v1741 = vmul.f32 %v1715, %v1655
        %v1742 = vmul.f32 %v1717, %v1655
        %v1743 = vmul.f32 %v1719, %v1655
        %v1744 = vmul.f32 %v1721, %v1655
        %v1745 = vmul.f32 %v1723, %v1655
        %v1746 = vmul.f32 %v1725, %v1655
        %v1747 = vmul.f32 %v1727, %v1655
        %v1748 = vmul.f32 %v1729, %v1655
        %v1749 = vmul.f32 %v1731, %v1655
        %v1750 = vmul.f32 %v1733, %v1655
        %v1751 = vmul.f32 %v1735, %v1655
        %v1752 = vadd.f32 %v1736, 1e-05
        %v1753 = vadd.f32 %v1737, 1e-05
        %v1754 = vadd.f32 %v1738, 1e-05
        %v1755 = vadd.f32 %v1739, 1e-05
        %v1756 = vadd.f32 %v1740, 1e-05
        %v1757 = vadd.f32 %v1741, 1e-05
        %v1758 = vadd.f32 %v1742, 1e-05
        %v1759 = vadd.f32 %v1743, 1e-05
        %v1760 = vadd.f32 %v1744, 1e-05
        %v1761 = vadd.f32 %v1745, 1e-05
        %v1762 = vadd.f32 %v1746, 1e-05
        %v1763 = vadd.f32 %v1747, 1e-05
        %v1764 = vadd.f32 %v1748, 1e-05
        %v1765 = vadd.f32 %v1749, 1e-05
        %v1766 = vadd.f32 %v1750, 1e-05
        %v1767 = vadd.f32 %v1751, 1e-05
        %v1768 = vrsqrt.pop %v1752
        %v1769 = vmul.f32 %v1768, %v1752
        %v1770 = vmul.f32 %v1769, %v1768
        %v1771 = vmul.f32 0.5, %v1770
        %v1772 = vsub.f32 1.5, %v1771
        %v1773 = vmul.f32 %v1768, %v1772
        %vm1774 = vweird.f32 %v1752
        %vm1775 = vweird.f32 %v1768
        %vm1776 = vmor %vm1774, %vm1775
        %v1777 = vsel %vm1776, %v1768, %v1773
        %v1778 = vrsqrt.pop %v1753
        %v1779 = vmul.f32 %v1778, %v1753
        %v1780 = vmul.f32 %v1779, %v1778
        %v1781 = vmul.f32 0.5, %v1780
        %v1782 = vsub.f32 1.5, %v1781
        %v1783 = vmul.f32 %v1778, %v1782
        %vm1784 = vweird.f32 %v1753
        %vm1785 = vweird.f32 %v1778
        %vm1786 = vmor %vm1784, %vm1785
        %v1787 = vsel %vm1786, %v1778, %v1783
        %v1788 = vrsqrt.pop %v1754
        %v1789 = vmul.f32 %v1788, %v1754
        %v1790 = vmul.f32 %v1789, %v1788
        %v1791 = vmul.f32 0.5, %v1790
        %v1792 = vsub.f32 1.5, %v1791
        %v1793 = vmul.f32 %v1788, %v1792
        %vm1794 = vweird.f32 %v1754
        %vm1795 = vweird.f32 %v1788
        %vm1796 = vmor %vm1794, %vm1795
        %v1797 = vsel %vm1796, %v1788, %v1793
        %v1798 = vrsqrt.pop %v1755
        %v1799 = vmul.f32 %v1798, %v1755
        %v1800 = vmul.f32 %v1799, %v1798
        %v1801 = vmul.f32 0.5, %v1800
        %v1802 = vsub.f32 1.5, %v1801
        %v1803 = vmul.f32 %v1798, %v1802
        %vm1804 = vweird.f32 %v1755
        %vm1805 = vweird.f32 %v1798
        %vm1806 = vmor %vm1804, %vm1805
        %v1807 = vsel %vm1806, %v1798, %v1803
        %v1808 = vrsqrt.pop %v1756
        %v1809 = vmul.f32 %v1808, %v1756
        %v1810 = vmul.f32 %v1809, %v1808
        %v1811 = vmul.f32 0.5, %v1810
        %v1812 = vsub.f32 1.5, %v1811
        %v1813 = vmul.f32 %v1808, %v1812
        %vm1814 = vweird.f32 %v1756
        %vm1815 = vweird.f32 %v1808
        %vm1816 = vmor %vm1814, %vm1815
        %v1817 = vsel %vm1816, %v1808, %v1813
        %v1818 = vrsqrt.pop %v1757
        %v1819 = vmul.f32 %v1818, %v1757
        %v1820 = vmul.f32 %v1819, %v1818
        %v1821 = vmul.f32 0.5, %v1820
        %v1822 = vsub.f32 1.5, %v1821
        %v1823 = vmul.f32 %v1818, %v1822
        %vm1824 = vweird.f32 %v1757
        %vm1825 = vweird.f32 %v1818
        %vm1826 = vmor %vm1824, %vm1825
        %v1827 = vsel %vm1826, %v1818, %v1823
        %v1828 = vrsqrt.pop %v1758
        %v1829 = vmul.f32 %v1828, %v1758
        %v1830 = vmul.f32 %v1829, %v1828
        %v1831 = vmul.f32 0.5, %v1830
        %v1832 = vsub.f32 1.5, %v1831
        %v1833 = vmul.f32 %v1828, %v1832
        %vm1834 = vweird.f32 %v1758
        %vm1835 = vweird.f32 %v1828
        %vm1836 = vmor %vm1834, %vm1835
        %v1837 = vsel %vm1836, %v1828, %v1833
        %v1838 = vrsqrt.pop %v1759
        %v1839 = vmul.f32 %v1838, %v1759
        %v1840 = vmul.f32 %v1839, %v1838
        %v1841 = vmul.f32 0.5, %v1840
        %v1842 = vsub.f32 1.5, %v1841
        %v1843 = vmul.f32 %v1838, %v1842
        %vm1844 = vweird.f32 %v1759
        %vm1845 = vweird.f32 %v1838
        %vm1846 = vmor %vm1844, %vm1845
        %v1847 = vsel %vm1846, %v1838, %v1843
        %v1848 = vrsqrt.pop %v1760
        %v1849 = vmul.f32 %v1848, %v1760
        %v1850 = vmul.f32 %v1849, %v1848
        %v1851 = vmul.f32 0.5, %v1850
        %v1852 = vsub.f32 1.5, %v1851
        %v1853 = vmul.f32 %v1848, %v1852
        %vm1854 = vweird.f32 %v1760
        %vm1855 = vweird.f32 %v1848
        %vm1856 = vmor %vm1854, %vm1855
        %v1857 = vsel %vm1856, %v1848, %v1853
        %v1858 = vrsqrt.pop %v1761
        %v1859 = vmul.f32 %v1858, %v1761
        %v1860 = vmul.f32 %v1859, %v1858
        %v1861 = vmul.f32 0.5, %v1860
        %v1862 = vsub.f32 1.5, %v1861
        %v1863 = vmul.f32 %v1858, %v1862
        %vm1864 = vweird.f32 %v1761
        %vm1865 = vweird.f32 %v1858
        %vm1866 = vmor %vm1864, %vm1865
        %v1867 = vsel %vm1866, %v1858, %v1863
        %v1868 = vrsqrt.pop %v1762
        %v1869 = vmul.f32 %v1868, %v1762
        %v1870 = vmul.f32 %v1869, %v1868
        %v1871 = vmul.f32 0.5, %v1870
        %v1872 = vsub.f32 1.5, %v1871
        %v1873 = vmul.f32 %v1868, %v1872
        %vm1874 = vweird.f32 %v1762
        %vm1875 = vweird.f32 %v1868
        %vm1876 = vmor %vm1874, %vm1875
        %v1877 = vsel %vm1876, %v1868, %v1873
        %v1878 = vrsqrt.pop %v1763
        %v1879 = vmul.f32 %v1878, %v1763
        %v1880 = vmul.f32 %v1879, %v1878
        %v1881 = vmul.f32 0.5, %v1880
        %v1882 = vsub.f32 1.5, %v1881
        %v1883 = vmul.f32 %v1878, %v1882
        %vm1884 = vweird.f32 %v1763
        %vm1885 = vweird.f32 %v1878
        %vm1886 = vmor %vm1884, %vm1885
        %v1887 = vsel %vm1886, %v1878, %v1883
        %v1888 = vrsqrt.pop %v1764
        %v1889 = vmul.f32 %v1888, %v1764
        %v1890 = vmul.f32 %v1889, %v1888
        %v1891 = vmul.f32 0.5, %v1890
        %v1892 = vsub.f32 1.5, %v1891
        %v1893 = vmul.f32 %v1888, %v1892
        %vm1894 = vweird.f32 %v1764
        %vm1895 = vweird.f32 %v1888
        %vm1896 = vmor %vm1894, %vm1895
        %v1897 = vsel %vm1896, %v1888, %v1893
        %v1898 = vrsqrt.pop %v1765
        %v1899 = vmul.f32 %v1898, %v1765
        %v1900 = vmul.f32 %v1899, %v1898
        %v1901 = vmul.f32 0.5, %v1900
        %v1902 = vsub.f32 1.5, %v1901
        %v1903 = vmul.f32 %v1898, %v1902
        %vm1904 = vweird.f32 %v1765
        %vm1905 = vweird.f32 %v1898
        %vm1906 = vmor %vm1904, %vm1905
        %v1907 = vsel %vm1906, %v1898, %v1903
        %v1908 = vrsqrt.pop %v1766
        %v1909 = vmul.f32 %v1908, %v1766
        %v1910 = vmul.f32 %v1909, %v1908
        %v1911 = vmul.f32 0.5, %v1910
        %v1912 = vsub.f32 1.5, %v1911
        %v1913 = vmul.f32 %v1908, %v1912
        %vm1914 = vweird.f32 %v1766
        %vm1915 = vweird.f32 %v1908
        %vm1916 = vmor %vm1914, %vm1915
        %v1917 = vsel %vm1916, %v1908, %v1913
        %v1918 = vrsqrt.pop %v1767
        %v1919 = vmul.f32 %v1918, %v1767
        %v1920 = vmul.f32 %v1919, %v1918
        %v1921 = vmul.f32 0.5, %v1920
        %v1922 = vsub.f32 1.5, %v1921
        %v1923 = vmul.f32 %v1918, %v1922
        %vm1924 = vweird.f32 %v1767
        %vm1925 = vweird.f32 %v1918
        %vm1926 = vmor %vm1924, %vm1925
        %v1927 = vsel %vm1926, %v1918, %v1923
        %v1928 = vmul.f32 %v1672, %v1777
        %v1929 = vmul.f32 %v1673, %v1787
        %v1930 = vmul.f32 %v1674, %v1797
        %v1931 = vmul.f32 %v1675, %v1807
        %v1932 = vmul.f32 %v1676, %v1817
        %v1933 = vmul.f32 %v1677, %v1827
        %v1934 = vmul.f32 %v1678, %v1837
        %v1935 = vmul.f32 %v1679, %v1847
        %v1936 = vmul.f32 %v1680, %v1857
        %v1937 = vmul.f32 %v1681, %v1867
        %v1938 = vmul.f32 %v1682, %v1877
        %v1939 = vmul.f32 %v1683, %v1887
        %v1940 = vmul.f32 %v1684, %v1897
        %v1941 = vmul.f32 %v1685, %v1907
        %v1942 = vmul.f32 %v1686, %v1917
        %v1943 = vmul.f32 %v1687, %v1927
        %v1944 = vld [vmem:[%s7] sm:$0x1]
        %v1946 = vperm.slane %v1944, 0
        %v1948 = vmul.f32 %v1928, %v1946
        %v1949 = vmul.f32 %v1929, %v1946
        %v1950 = vmul.f32 %v1930, %v1946
        %v1951 = vmul.f32 %v1931, %v1946
        %v1952 = vmul.f32 %v1932, %v1946
        %v1953 = vmul.f32 %v1933, %v1946
        %v1954 = vmul.f32 %v1934, %v1946
        %v1955 = vmul.f32 %v1935, %v1946
        %v1956 = vmul.f32 %v1936, %v1946
        %v1957 = vmul.f32 %v1937, %v1946
        %v1958 = vmul.f32 %v1938, %v1946
        %v1959 = vmul.f32 %v1939, %v1946
        %v1960 = vmul.f32 %v1940, %v1946
        %v1961 = vmul.f32 %v1941, %v1946
        %v1962 = vmul.f32 %v1942, %v1946
        %v1963 = vmul.f32 %v1943, %v1946
        %v1964 = vld [vmem:[#allocation9] sm:$0x1]
        %v1966 = vperm.slane %v1964, 0
        %v1968 = vadd.f32 %v1948, %v1966
        %v1969 = vadd.f32 %v1949, %v1966
        %v1970 = vadd.f32 %v1950, %v1966
        %v1971 = vadd.f32 %v1951, %v1966
        %v1972 = vadd.f32 %v1952, %v1966
        %v1973 = vadd.f32 %v1953, %v1966
        %v1974 = vadd.f32 %v1954, %v1966
        %v1975 = vadd.f32 %v1955, %v1966
        %v1976 = vadd.f32 %v1956, %v1966
        %v1977 = vadd.f32 %v1957, %v1966
        %v1978 = vadd.f32 %v1958, %v1966
        %v1979 = vadd.f32 %v1959, %v1966
        %v1980 = vadd.f32 %v1960, %v1966
        %v1981 = vadd.f32 %v1961, %v1966
        %v1982 = vadd.f32 %v1962, %v1966
        %v1983 = vadd.f32 %v1963, %v1966
        %v1984 = vpack.c.bf16 %v1969, %v1968
        %v1985 = vpack.c.bf16 %v1971, %v1970
        %v1986 = vpack.c.bf16 %v1973, %v1972
        %v1987 = vpack.c.bf16 %v1975, %v1974
        %v1988 = vpack.c.bf16 %v1977, %v1976
        %v1989 = vpack.c.bf16 %v1979, %v1978
        %v1990 = vpack.c.bf16 %v1981, %v1980
        %v1991 = vpack.c.bf16 %v1983, %v1982
        %v1992 = vld [vmem:[#allocation10] sm:$0xf]
        %v1993 = vld [vmem:[#allocation10 + $0x4] sm:$0xf]
        %v1994 = vld [vmem:[#allocation10 + $0x8] sm:$0xf]
        %v1995 = vld [vmem:[#allocation10 + $0xc] sm:$0xf]
        %v1996 = vld [vmem:[#allocation10 + $0x10] sm:$0xf]
        %v1997 = vld [vmem:[#allocation10 + $0x14] sm:$0xf]
        %v1998 = vld [vmem:[#allocation10 + $0x18] sm:$0xf]
        %v1999 = vld [vmem:[#allocation10 + $0x1c] sm:$0xf]
        %v2000 = vld [vmem:[#allocation10 + $0x20] sm:$0xf]
        %v2001 = vld [vmem:[#allocation10 + $0x24] sm:$0xf]
        %v2002 = vld [vmem:[#allocation10 + $0x28] sm:$0xf]
        %v2003 = vld [vmem:[#allocation10 + $0x2c] sm:$0xf]
        %v2004 = vld [vmem:[#allocation10 + $0x30] sm:$0xf]
        %v2005 = vld [vmem:[#allocation10 + $0x34] sm:$0xf]
        %v2006 = vld [vmem:[#allocation10 + $0x38] sm:$0xf]
        %v2007 = vld [vmem:[#allocation10 + $0x3c] sm:$0xf]
        %v2008 = vld [vmem:[#allocation12] sm:$0x1]
        %v2010 = vperm.slane %v2008, 0
        %v2028 = vunpack.c.l.b16 %v1992
        %v2029 = vunpack.c.l.b16 %v1993
        %v2030 = vunpack.c.l.b16 %v1994
        %v2031 = vunpack.c.l.b16 %v1995
        %v2032 = vunpack.c.l.b16 %v1996
        %v2033 = vunpack.c.l.b16 %v1997
        %v2034 = vunpack.c.l.b16 %v1998
        %v2035 = vunpack.c.l.b16 %v1999
        %v2036 = vunpack.c.l.b16 %v2000
        %v2037 = vunpack.c.l.b16 %v2001
        %v2038 = vunpack.c.l.b16 %v2002
        %v2039 = vunpack.c.l.b16 %v2003
        %v2040 = vunpack.c.l.b16 %v2004
        %v2041 = vunpack.c.l.b16 %v2005
        %v2042 = vunpack.c.l.b16 %v2006
        %v2043 = vunpack.c.l.b16 %v2007
        %v2044 = vpack.c.b16 %v2029, %v2028
        %v2045 = vpack.c.b16 %v2031, %v2030
        %v2046 = vpack.c.b16 %v2033, %v2032
        %v2047 = vpack.c.b16 %v2035, %v2034
        %v2048 = vpack.c.b16 %v2037, %v2036
        %v2049 = vpack.c.b16 %v2039, %v2038
        %v2050 = vpack.c.b16 %v2041, %v2040
        %v2051 = vpack.c.b16 %v2043, %v2042
        %2060 = vmatpush.bf16.msra.mxu0 %v2051
        %2061 = vmatpush.bf16.msra.mxu0 %v2050
        %2062 = vmatpush.bf16.msra.mxu0 %v2049
        %2063 = vmatpush.bf16.msra.mxu0 %v2048
        %2064 = vmatpush.bf16.msra.mxu0 %v2047
        %2065 = vmatpush.bf16.msra.mxu0 %v2046
        %2066 = vmatpush.bf16.msra.mxu0 %v2045
        %2067 = vmatpush.bf16.msra.mxu0 %v2044
        %2068 = vmatmul.bf16.gmra.mxu0 %v1984
        %v2069 = vpop.f32.mrf.mxu0
        %v2070 = vadd.f32 %v2010, %v2069
        %v2071 = vpop.f32.mrf.mxu0
        %v2072 = vadd.f32 %v2010, %v2071
        %2073 = vmatmul.bf16.gmra.mxu0 %v1985
        %v2074 = vpop.f32.mrf.mxu0
        %v2075 = vadd.f32 %v2010, %v2074
        %v2076 = vpop.f32.mrf.mxu0
        %v2077 = vadd.f32 %v2010, %v2076
        %2078 = vmatmul.bf16.gmra.mxu0 %v1986
        %v2079 = vpop.f32.mrf.mxu0
        %v2080 = vadd.f32 %v2010, %v2079
        %v2081 = vpop.f32.mrf.mxu0
        %v2082 = vadd.f32 %v2010, %v2081
        %2083 = vmatmul.bf16.gmra.mxu0 %v1987
        %v2084 = vpop.f32.mrf.mxu0
        %v2085 = vadd.f32 %v2010, %v2084
        %v2086 = vpop.f32.mrf.mxu0
        %v2087 = vadd.f32 %v2010, %v2086
        %2088 = vmatmul.bf16.gmra.mxu0 %v1988
        %v2089 = vpop.f32.mrf.mxu0
        %v2090 = vadd.f32 %v2010, %v2089
        %v2091 = vpop.f32.mrf.mxu0
        %v2092 = vadd.f32 %v2010, %v2091
        %2093 = vmatmul.bf16.gmra.mxu0 %v1989
        %v2094 = vpop.f32.mrf.mxu0
        %v2095 = vadd.f32 %v2010, %v2094
        %v2096 = vpop.f32.mrf.mxu0
        %v2097 = vadd.f32 %v2010, %v2096
        %2098 = vmatmul.bf16.gmra.mxu0 %v1990
        %v2099 = vpop.f32.mrf.mxu0
        %v2100 = vadd.f32 %v2010, %v2099
        %v2101 = vpop.f32.mrf.mxu0
        %v2102 = vadd.f32 %v2010, %v2101
        %2103 = vmatmul.bf16.gmra.mxu0 %v1991
        %v2104 = vpop.f32.mrf.mxu0
        %v2105 = vadd.f32 %v2010, %v2104
        %v2106 = vpop.f32.mrf.mxu0
        %v2107 = vadd.f32 %v2010, %v2106
        %2108 = vdwg.mxu0
        %v2109 = vpack.c.bf16 %v2070, %v2070
        %v2110 = vpack.c.bf16 %v2072, %v2072
        %v2111 = vpack.c.bf16 %v2075, %v2075
        %v2112 = vpack.c.bf16 %v2077, %v2077
        %v2113 = vpack.c.bf16 %v2080, %v2080
        %v2114 = vpack.c.bf16 %v2082, %v2082
        %v2115 = vpack.c.bf16 %v2085, %v2085
        %v2116 = vpack.c.bf16 %v2087, %v2087
        %v2117 = vpack.c.bf16 %v2090, %v2090
        %v2118 = vpack.c.bf16 %v2092, %v2092
        %v2119 = vpack.c.bf16 %v2095, %v2095
        %v2120 = vpack.c.bf16 %v2097, %v2097
        %v2121 = vpack.c.bf16 %v2100, %v2100
        %v2122 = vpack.c.bf16 %v2102, %v2102
        %v2123 = vpack.c.bf16 %v2105, %v2105
        %v2124 = vpack.c.bf16 %v2107, %v2107
        %2125 = vst [vmem:[%s504] sm:$0xf] %v2109
        %2126 = vst [vmem:[%s504 + $0x4] sm:$0xf] %v2110
        %2127 = vst [vmem:[%s504 + $0x8] sm:$0xf] %v2111
        %2128 = vst [vmem:[%s504 + $0xc] sm:$0xf] %v2112
        %2129 = vst [vmem:[%s504 + $0x10] sm:$0xf] %v2113
        %2130 = vst [vmem:[%s504 + $0x14] sm:$0xf] %v2114
        %2131 = vst [vmem:[%s504 + $0x18] sm:$0xf] %v2115
        %2132 = vst [vmem:[%s504 + $0x1c] sm:$0xf] %v2116
        %2133 = vst [vmem:[%s504 + $0x20] sm:$0xf] %v2117
        %2134 = vst [vmem:[%s504 + $0x24] sm:$0xf] %v2118
        %2135 = vst [vmem:[%s504 + $0x28] sm:$0xf] %v2119
        %2136 = vst [vmem:[%s504 + $0x2c] sm:$0xf] %v2120
        %2137 = vst [vmem:[%s504 + $0x30] sm:$0xf] %v2121
        %2138 = vst [vmem:[%s504 + $0x34] sm:$0xf] %v2122
        %2139 = vst [vmem:[%s504 + $0x38] sm:$0xf] %v2123
        %2140 = vst [vmem:[%s504 + $0x3c] sm:$0xf] %v2124
        %s2141 = smul.u32 16, %s28
        %p2142 = scmp.lt.s32.totalorder %s2141, 63
        %s2143 = scalar_select %p2142, %s2141, 63
        %s2144 = smul.addr %s2143, 4
        %s2145 = scalar_lea.vmem %s11, %s2144
        // Predicated region
        $region93: #{fwd.1} parent=63 // pred_check
          %p2146 = pneg %p282
        $region94: #{fwd.1} parent=63 // pred_check_branch
          %2148 = sbr.rel (%p2146) target = $region96
        $region95: #{fwd.1} parent=63 // pred_region
          %s2149 = smul.u32 16, %s28
        $region96: #{fwd.1} parent=63 // pred_fallthru
          _
      $region64: #{fwd.1} parent=5 // pred_fallthru
        _
      %p2150 = scmp.le.s32.totalorder 2, %s23
      // Predicated region
      $region97: #{fwd.1} parent=5 // pred_check
        %p2151 = pneg %p2150
      $region98: #{fwd.1} parent=5 // pred_check_branch
        %2153 = sbr.rel (%p2151) target = $region100
      $region99: #{fwd.1} parent=5 // pred_region
        %s2154 = ssub.s32 %s23, 2
        // Predicated region
        $region101: #{fwd.1} parent=99 // pred_check
          %p2155 = pneg %p288
        $region102: #{fwd.1} parent=99 // pred_check_branch
          %2157 = sbr.rel (%p2155) target = $region104
        $region103: #{fwd.1} parent=99 // pred_region
          %s2158 = smul.u32 16, %s29
          %p2159 = scmp.lt.s32.totalorder %s2158, 63
          %s2160 = scalar_select %p2159, %s2158, 63
          %s2161 = smul.addr %s2160, 4
          %s2162 = scalar_lea.vmem %s11, %s2161
        $region104: #{fwd.1} parent=99 // pred_fallthru
          _
      $region100: #{fwd.1} parent=5 // pred_fallthru
        _
    $region6: #{fwd.1} parent=1 // loop_footer
      %s27 = sadd.s32 1, %s23
    $region7: #{fwd.1} parent=1 // loop_footer_branch
      %22 = sbr.rel target = $region3
    $region8: #{fwd.1} parent=1 // loop_exit
      _
    %2163 = vsyncpa [#allocation3], 1
    %s2164 = scalar_lea.sflag [#allocation3], 1
    %2165 = vsyncpa %s2164, 1
    %2166 = vsyncpa [#allocation5], 1
    %2167 = vsyncpa [#allocation8], 1
    %2168 = vsyncpa [#allocation11], 1

</llo_original>
